<compile_context>
chip_gen: v7x
topology: tpu7x:2x2x1
jax: 0.10.0
libtpu: 0.0.40
codegen_flags: <defaults>
</compile_context>

<pallas_src>
import numpy as np
import jax
import jax.numpy as jnp
from jax.experimental import pallas as pl
from jax.experimental.pallas import tpu as pltpu

# ----- model hyper-parameters (small, consistent with the module) -----
IN_FEATURES = 8
HIDDEN = 32
OUT_FEATURES = 4
NUM_LAYERS = 2
NUM_NODES = 16
SEQ_LEN = 6
OUT_PAD = 128  # lane-dense padded decoder output width
TN = SEQ_LEN * NUM_NODES  # 96 time-batched rows

# ----- packed-buffer row offsets (all 8-row aligned, data at lane offset 0) --
OFF_X = 0                      # (96, 8)   time-batched node features
OFF_W0 = OFF_X + TN            # (8, 32)   conv_layers[0] weight
OFF_B0 = OFF_W0 + IN_FEATURES  # (1, 32)   conv_layers[0] bias   (8-row slot)
OFF_WS = OFF_B0 + 8            # (2*32,32) W_self * bn_scale, stacked by layer
OFF_WN = OFF_WS + NUM_LAYERS * HIDDEN   # (2*32,32) W_nei * bn_scale
OFF_BC = OFF_WN + NUM_LAYERS * HIDDEN   # layer l bias at OFF_BC + 8*l (1,32)
OFF_WIH = OFF_BC + 8 * NUM_LAYERS       # (32, 128) LSTM input weight
OFF_WHH = OFF_WIH + HIDDEN              # (32, 128) LSTM hidden weight
OFF_BL = OFF_WHH + HIDDEN               # (1, 128)  bih + bhh      (8-row slot)
OFF_WDEC = OFF_BL + 8                   # (32, 128) decoder weight (padded)
OFF_BDEC = OFF_WDEC + HIDDEN            # (1, 128)  decoder bias   (8-row slot)
P_ROWS = OFF_BDEC + 8                   # 368 rows total (~188 KiB f32)


# ---------------------------------------------------------------------------
# Pallas kernel: single invocation.
# ---------------------------------------------------------------------------
def meteo_graphsage_kernel(a_ref, p_ref, out_ref):
    H = HIDDEN
    N = NUM_NODES
    T = SEQ_LEN
    F = IN_FEATURES

    # adjacency: bf16 in HBM/VMEM (half-size DMA), converted once for reuse
    A = a_ref[...].astype(jnp.float32)                       # (96, 96)

    # ---- input projection: conv_layers[0] ----
    X = p_ref[OFF_X:OFF_X + T * N, 0:F]                      # (96, 8)
    W0 = p_ref[OFF_W0:OFF_W0 + F, 0:H]                       # (8, 32)
    b0 = p_ref[OFF_B0:OFF_B0 + 1, 0:H]                       # (1, 32)
    h = jnp.dot(X, W0, preferred_element_type=jnp.float32) + b0

    # ---- GraphSAGE layers (BN-eval + biases folded into Ws/Wn/b) ----
    for l in range(NUM_LAYERS):
        Ws = p_ref[OFF_WS + l * H:OFF_WS + (l + 1) * H, 0:H]  # (32, 32)
        Wn = p_ref[OFF_WN + l * H:OFF_WN + (l + 1) * H, 0:H]  # (32, 32)
        bc = p_ref[OFF_BC + 8 * l:OFF_BC + 8 * l + 1, 0:H]    # (1, 32)
        agg = jnp.dot(A, h, preferred_element_type=jnp.float32)   # neighbor mean, all T
        comb = (jnp.dot(h, Ws, preferred_element_type=jnp.float32)
                + jnp.dot(agg, Wn, preferred_element_type=jnp.float32)
                + bc)
        comb = jnp.maximum(comb, 0.0)                          # ReLU (dropout=identity)
        h = h + comb                                           # residual

    # ---- LSTM over T: input projection hoisted out of the recurrence ----
    Wih = p_ref[OFF_WIH:OFF_WIH + H, :]                        # (32, 128)
    Whh = p_ref[OFF_WHH:OFF_WHH + H, :]                        # (32, 128)
    bL = p_ref[OFF_BL:OFF_BL + 1, :]                           # (1, 128)
    gates_x = jnp.dot(h, Wih, preferred_element_type=jnp.float32) + bL   # (96, 128)

    h_l = jnp.zeros((N, H), jnp.float32)
    c_l = jnp.zeros((N, H), jnp.float32)
    for t in range(T):
        gates = (gates_x[t * N:(t + 1) * N, :]
                 + jnp.dot(h_l, Whh, preferred_element_type=jnp.float32))  # (16, 128)
        # one full-width sigmoid + one full-width tanh EUP pass, slice after
        sig = jax.nn.sigmoid(gates)
        tnh = jnp.tanh(gates)
        i_g = sig[:, 0:H]
        f_g = sig[:, H:2 * H]
        g_g = tnh[:, 2 * H:3 * H]
        o_g = sig[:, 3 * H:4 * H]
        c_l = f_g * c_l + i_g * g_g
        h_l = o_g * jnp.tanh(c_l)

    # ---- decoder on last_out = rnn_out[-1]; lane-dense padded output ----
    Wdec = p_ref[OFF_WDEC:OFF_WDEC + H, :]                     # (32, 128)
    bdec = p_ref[OFF_BDEC:OFF_BDEC + 1, :]                     # (1, 128)
    out_ref[...] = (jnp.dot(h_l, Wdec, preferred_element_type=jnp.float32)
                    + bdec).astype(out_ref.dtype)


# ---------------------------------------------------------------------------
# Host wrapper: weight folding + input packing into 2 buffers, one pallas_call.
# ---------------------------------------------------------------------------
def meteo_graphsage_forward(x_seq, a_seq, params):
    T, N, F = x_seq.shape
    H = HIDDEN
    O = OUT_FEATURES

    # time-batched node features and block-diagonal adjacency (bf16 DMA)
    x_bd = x_seq.reshape(T * N, F)
    eye_t = jnp.eye(T, dtype=jnp.float32)
    a_bd = (eye_t[:, None, :, None] * a_seq[:, :, None, :]).reshape(T * N, T * N)
    a_bd = a_bd.astype(jnp.bfloat16)

    # fold BatchNorm(eval) + both biases into the layer weights
    scale = params["bn_scale"]                               # (L, H)
    shift = params["bn_shift"]                               # (L, H)
    ws_eff = params["ws"] * scale[:, None, :]                # (L, H, H)
    wn_eff = params["wn"] * scale[:, None, :]                # (L, H, H)
    b_eff = (params["bs"] + params["bn"]) * scale + shift    # (L, H)

    # pack everything (features + weights + biases) into one 128-lane buffer
    packed = jnp.zeros((P_ROWS, 128), jnp.float32)
    packed = packed.at[OFF_X:OFF_X + T * N, :F].set(x_bd)
    packed = packed.at[OFF_W0:OFF_W0 + F, :H].set(params["w0"])
    packed = packed.at[OFF_B0, :H].set(params["b0"][0])
    packed = packed.at[OFF_WS:OFF_WS + NUM_LAYERS * H, :H].set(
        ws_eff.reshape(NUM_LAYERS * H, H))
    packed = packed.at[OFF_WN:OFF_WN + NUM_LAYERS * H, :H].set(
        wn_eff.reshape(NUM_LAYERS * H, H))
    for l in range(NUM_LAYERS):
        packed = packed.at[OFF_BC + 8 * l, :H].set(b_eff[l])
    packed = packed.at[OFF_WIH:OFF_WIH + H, :].set(params["wih"])
    packed = packed.at[OFF_WHH:OFF_WHH + H, :].set(params["whh"])
    packed = packed.at[OFF_BL, :].set((params["bih"] + params["bhh"])[0])
    packed = packed.at[OFF_WDEC:OFF_WDEC + H, :O].set(params["wdec"])
    packed = packed.at[OFF_BDEC, :O].set(params["bdec"][0])

    vmem_spec = lambda: pl.BlockSpec(memory_space=pltpu.MemorySpace.VMEM)

    out_padded = pl.pallas_call(
        meteo_graphsage_kernel,
        out_shape=jax.ShapeDtypeStruct((N, OUT_PAD), jnp.float32),
        in_specs=[vmem_spec(), vmem_spec()],
        out_specs=vmem_spec(),
    )(a_bd, packed)

    return out_padded[:, :O]


# ---------------------------------------------------------------------------
# Deterministic parameter init (PyTorch-style uniform(-1/sqrt(fan_in), ...)).
# Linear weights are pre-transposed to [in, out] so the kernel does x @ W + b.
# ---------------------------------------------------------------------------
def init_params(key):
    keys = jax.random.split(key, 12)

    def lin(k, fan_in, shape):
        bound = 1.0 / np.sqrt(fan_in)
        return jax.random.uniform(k, shape, jnp.float32, -bound, bound)

    p = {}
    p["w0"] = lin(keys[0], IN_FEATURES, (IN_FEATURES, HIDDEN))
    p["b0"] = lin(keys[1], IN_FEATURES, (1, HIDDEN))
    p["ws"] = lin(keys[2], HIDDEN, (NUM_LAYERS, HIDDEN, HIDDEN))
    p["bs"] = lin(keys[3], HIDDEN, (NUM_LAYERS, HIDDEN))
    p["wn"] = lin(keys[4], HIDDEN, (NUM_LAYERS, HIDDEN, HIDDEN))
    p["bn"] = lin(keys[5], HIDDEN, (NUM_LAYERS, HIDDEN))
    # BatchNorm1d eval: weight=1, bias=0, running_mean=0, running_var=1, eps=1e-5
    eps = 1e-5
    gamma = jnp.ones((NUM_LAYERS, HIDDEN), jnp.float32)
    beta = jnp.zeros((NUM_LAYERS, HIDDEN), jnp.float32)
    r_mean = jnp.zeros((NUM_LAYERS, HIDDEN), jnp.float32)
    r_var = jnp.ones((NUM_LAYERS, HIDDEN), jnp.float32)
    scale = gamma / jnp.sqrt(r_var + eps)
    p["bn_scale"] = scale
    p["bn_shift"] = beta - r_mean * scale
    # LSTM(hidden -> hidden), single layer
    p["wih"] = lin(keys[6], HIDDEN, (HIDDEN, 4 * HIDDEN))
    p["bih"] = lin(keys[7], HIDDEN, (1, 4 * HIDDEN))
    p["whh"] = lin(keys[8], HIDDEN, (HIDDEN, 4 * HIDDEN))
    p["bhh"] = lin(keys[9], HIDDEN, (1, 4 * HIDDEN))
    # decoder Linear(hidden -> out)  (use_attention=False)
    p["wdec"] = lin(keys[10], HIDDEN, (HIDDEN, OUT_FEATURES))
    p["bdec"] = lin(keys[11], HIDDEN, (1, OUT_FEATURES))
    return p


# ---------------------------------------------------------------------------
# Pure-JAX reference (unfolded weights) for correctness check.
# ---------------------------------------------------------------------------
def reference_forward(x_seq, a_seq, p):
    T = x_seq.shape[0]
    H = HIDDEN
    embs = []
    for t in range(T):
        h = x_seq[t] @ p["w0"] + p["b0"]
        for l in range(NUM_LAYERS):
            agg = a_seq[t] @ h
            comb = h @ p["ws"][l] + p["bs"][l] + agg @ p["wn"][l] + p["bn"][l]
            comb = comb * p["bn_scale"][l] + p["bn_shift"][l]
            comb = jnp.maximum(comb, 0.0)
            h = h + comb
        embs.append(h)
    h_l = jnp.zeros((NUM_NODES, H), jnp.float32)
    c_l = jnp.zeros((NUM_NODES, H), jnp.float32)
    for t in range(T):
        g = embs[t] @ p["wih"] + p["bih"] + h_l @ p["whh"] + p["bhh"]
        i_g = jax.nn.sigmoid(g[:, :H])
        f_g = jax.nn.sigmoid(g[:, H:2 * H])
        g_g = jnp.tanh(g[:, 2 * H:3 * H])
        o_g = jax.nn.sigmoid(g[:, 3 * H:])
        c_l = f_g * c_l + i_g * g_g
        h_l = o_g * jnp.tanh(c_l)
    return h_l @ p["wdec"] + p["bdec"]


def make_adjacency(key, n, num_edges):
    k1, k2 = jax.random.split(key)
    src = jax.random.randint(k1, (num_edges,), 0, n)
    dst = jax.random.randint(k2, (num_edges,), 0, n)
    A = jnp.zeros((n, n), jnp.float32).at[dst, src].add(1.0)
    deg = A.sum(axis=1, keepdims=True)
    return jnp.where(deg > 0, A / jnp.where(deg > 0, deg, 1.0), 0.0)


if __name__ == "__main__":
    key = jax.random.PRNGKey(0)
    kp, kx, ke = jax.random.split(key, 3)

    params = init_params(kp)
    x_seq = jax.random.normal(kx, (SEQ_LEN, NUM_NODES, IN_FEATURES), jnp.float32)
    ekeys = jax.random.split(ke, SEQ_LEN)
    a_seq = jnp.stack([make_adjacency(ekeys[t], NUM_NODES, 3 * NUM_NODES)
                       for t in range(SEQ_LEN)], axis=0)

    preds = meteo_graphsage_forward(x_seq, a_seq, params)
    preds = jax.block_until_ready(preds)

    ref = reference_forward(x_seq, a_seq, params)
    np.testing.assert_allclose(np.asarray(preds), np.asarray(ref), rtol=2e-3, atol=2e-3)

    print("KERNEL_OK")
</pallas_src>

<mosaic_0001>
module attributes {stable_mosaic.version = 11 : i64} {
  func.func @meteo_graphsage_kernel(%arg0: memref<96x96xbf16, #tpu.memory_space<vmem>>, %arg1: memref<368x128xf32, #tpu.memory_space<vmem>>, %arg2: memref<16x128xf32, #tpu.memory_space<vmem>>) attributes {dimension_semantics = [], scalar_prefetch = 0 : i64, scratch_operands = 0 : i64, tpu.core_type = #tpu.core_type<tc>} {
    %c0 = arith.constant 0 : index
    %c0_0 = arith.constant 0 : index
    %0 = vector.load %arg0[%c0, %c0_0] : memref<96x96xbf16, #tpu.memory_space<vmem>>, vector<96x96xbf16>
    %1 = arith.extf %0 : vector<96x96xbf16> to vector<96x96xf32>
    %c0_1 = arith.constant 0 : index
    %c0_2 = arith.constant 0 : index
    %2 = vector.load %arg1[%c0_1, %c0_2] : memref<368x128xf32, #tpu.memory_space<vmem>>, vector<96x8xf32>
    %c96 = arith.constant 96 : index
    %c0_3 = arith.constant 0 : index
    %3 = vector.load %arg1[%c96, %c0_3] : memref<368x128xf32, #tpu.memory_space<vmem>>, vector<8x32xf32>
    %c104 = arith.constant 104 : index
    %c0_4 = arith.constant 0 : index
    %4 = vector.load %arg1[%c104, %c0_4] : memref<368x128xf32, #tpu.memory_space<vmem>>, vector<1x32xf32>
    %cst = arith.constant dense<0.000000e+00> : vector<96x32xf32>
    %5 = tpu.matmul %2, %3, %cst {dimension_numbers = #tpu.dot_dimension_numbers<[1], [0], [0], [1], [0, 0, 1, 1], [], []>} : vector<96x8xf32>, vector<8x32xf32>, vector<96x32xf32> -> vector<96x32xf32>
    %6 = vector.broadcast %4 : vector<1x32xf32> to vector<96x32xf32>
    %7 = arith.addf %5, %6 : vector<96x32xf32>
    %c112 = arith.constant 112 : index
    %c0_5 = arith.constant 0 : index
    %8 = vector.load %arg1[%c112, %c0_5] : memref<368x128xf32, #tpu.memory_space<vmem>>, vector<32x32xf32>
    %c176 = arith.constant 176 : index
    %c0_6 = arith.constant 0 : index
    %9 = vector.load %arg1[%c176, %c0_6] : memref<368x128xf32, #tpu.memory_space<vmem>>, vector<32x32xf32>
    %c240 = arith.constant 240 : index
    %c0_7 = arith.constant 0 : index
    %10 = vector.load %arg1[%c240, %c0_7] : memref<368x128xf32, #tpu.memory_space<vmem>>, vector<1x32xf32>
    %cst_8 = arith.constant dense<0.000000e+00> : vector<96x32xf32>
    %11 = tpu.matmul %1, %7, %cst_8 {dimension_numbers = #tpu.dot_dimension_numbers<[1], [0], [0], [1], [0, 0, 1, 1], [], []>} : vector<96x96xf32>, vector<96x32xf32>, vector<96x32xf32> -> vector<96x32xf32>
    %cst_9 = arith.constant dense<0.000000e+00> : vector<96x32xf32>
    %12 = tpu.matmul %7, %8, %cst_9 {dimension_numbers = #tpu.dot_dimension_numbers<[1], [0], [0], [1], [0, 0, 1, 1], [], []>} : vector<96x32xf32>, vector<32x32xf32>, vector<96x32xf32> -> vector<96x32xf32>
    %cst_10 = arith.constant dense<0.000000e+00> : vector<96x32xf32>
    %13 = tpu.matmul %11, %9, %cst_10 {dimension_numbers = #tpu.dot_dimension_numbers<[1], [0], [0], [1], [0, 0, 1, 1], [], []>} : vector<96x32xf32>, vector<32x32xf32>, vector<96x32xf32> -> vector<96x32xf32>
    %14 = arith.addf %12, %13 : vector<96x32xf32>
    %15 = vector.broadcast %10 : vector<1x32xf32> to vector<96x32xf32>
    %16 = arith.addf %14, %15 : vector<96x32xf32>
    %cst_11 = arith.constant 0.000000e+00 : f32
    %17 = vector.broadcast %cst_11 : f32 to vector<96x32xf32>
    %18 = arith.maximumf %16, %17 : vector<96x32xf32>
    %19 = arith.addf %7, %18 : vector<96x32xf32>
    %c144 = arith.constant 144 : index
    %c0_12 = arith.constant 0 : index
    %20 = vector.load %arg1[%c144, %c0_12] : memref<368x128xf32, #tpu.memory_space<vmem>>, vector<32x32xf32>
    %c208 = arith.constant 208 : index
    %c0_13 = arith.constant 0 : index
    %21 = vector.load %arg1[%c208, %c0_13] : memref<368x128xf32, #tpu.memory_space<vmem>>, vector<32x32xf32>
    %c248 = arith.constant 248 : index
    %c0_14 = arith.constant 0 : index
    %22 = vector.load %arg1[%c248, %c0_14] : memref<368x128xf32, #tpu.memory_space<vmem>>, vector<1x32xf32>
    %cst_15 = arith.constant dense<0.000000e+00> : vector<96x32xf32>
    %23 = tpu.matmul %1, %19, %cst_15 {dimension_numbers = #tpu.dot_dimension_numbers<[1], [0], [0], [1], [0, 0, 1, 1], [], []>} : vector<96x96xf32>, vector<96x32xf32>, vector<96x32xf32> -> vector<96x32xf32>
    %cst_16 = arith.constant dense<0.000000e+00> : vector<96x32xf32>
    %24 = tpu.matmul %19, %20, %cst_16 {dimension_numbers = #tpu.dot_dimension_numbers<[1], [0], [0], [1], [0, 0, 1, 1], [], []>} : vector<96x32xf32>, vector<32x32xf32>, vector<96x32xf32> -> vector<96x32xf32>
    %cst_17 = arith.constant dense<0.000000e+00> : vector<96x32xf32>
    %25 = tpu.matmul %23, %21, %cst_17 {dimension_numbers = #tpu.dot_dimension_numbers<[1], [0], [0], [1], [0, 0, 1, 1], [], []>} : vector<96x32xf32>, vector<32x32xf32>, vector<96x32xf32> -> vector<96x32xf32>
    %26 = arith.addf %24, %25 : vector<96x32xf32>
    %27 = vector.broadcast %22 : vector<1x32xf32> to vector<96x32xf32>
    %28 = arith.addf %26, %27 : vector<96x32xf32>
    %cst_18 = arith.constant 0.000000e+00 : f32
    %29 = vector.broadcast %cst_18 : f32 to vector<96x32xf32>
    %30 = arith.maximumf %28, %29 : vector<96x32xf32>
    %31 = arith.addf %19, %30 : vector<96x32xf32>
    %c256 = arith.constant 256 : index
    %c0_19 = arith.constant 0 : index
    %32 = vector.load %arg1[%c256, %c0_19] : memref<368x128xf32, #tpu.memory_space<vmem>>, vector<32x128xf32>
    %c288 = arith.constant 288 : index
    %c0_20 = arith.constant 0 : index
    %33 = vector.load %arg1[%c288, %c0_20] : memref<368x128xf32, #tpu.memory_space<vmem>>, vector<32x128xf32>
    %c320 = arith.constant 320 : index
    %c0_21 = arith.constant 0 : index
    %34 = vector.load %arg1[%c320, %c0_21] : memref<368x128xf32, #tpu.memory_space<vmem>>, vector<1x128xf32>
    %cst_22 = arith.constant dense<0.000000e+00> : vector<96x128xf32>
    %35 = tpu.matmul %31, %32, %cst_22 {dimension_numbers = #tpu.dot_dimension_numbers<[1], [0], [0], [1], [0, 0, 1, 1], [], []>} : vector<96x32xf32>, vector<32x128xf32>, vector<96x128xf32> -> vector<96x128xf32>
    %36 = vector.broadcast %34 : vector<1x128xf32> to vector<96x128xf32>
    %37 = arith.addf %35, %36 : vector<96x128xf32>
    %cst_23 = arith.constant 0.000000e+00 : f32
    %38 = vector.broadcast %cst_23 : f32 to vector<16x32xf32>
    %cst_24 = arith.constant 0.000000e+00 : f32
    %39 = vector.broadcast %cst_24 : f32 to vector<16x32xf32>
    %40 = vector.extract_strided_slice %37 {offsets = [0, 0], sizes = [16, 128], strides = [1, 1]} : vector<96x128xf32> to vector<16x128xf32>
    %cst_25 = arith.constant dense<0.000000e+00> : vector<16x128xf32>
    %41 = tpu.matmul %38, %33, %cst_25 {dimension_numbers = #tpu.dot_dimension_numbers<[1], [0], [0], [1], [0, 0, 1, 1], [], []>} : vector<16x32xf32>, vector<32x128xf32>, vector<16x128xf32> -> vector<16x128xf32>
    %42 = arith.addf %40, %41 : vector<16x128xf32>
    %43 = arith.negf %42 : vector<16x128xf32>
    %44 = math.exp %43 : vector<16x128xf32>
    %cst_26 = arith.constant 1.000000e+00 : f32
    %45 = vector.broadcast %cst_26 : f32 to vector<16x128xf32>
    %46 = arith.addf %45, %44 : vector<16x128xf32>
    %47 = arith.divf %45, %46 : vector<16x128xf32>
    %48 = math.tanh %42 : vector<16x128xf32>
    %49 = vector.extract_strided_slice %47 {offsets = [0, 0], sizes = [16, 32], strides = [1, 1]} : vector<16x128xf32> to vector<16x32xf32>
    %50 = vector.extract_strided_slice %47 {offsets = [0, 32], sizes = [16, 32], strides = [1, 1]} : vector<16x128xf32> to vector<16x32xf32>
    %51 = vector.extract_strided_slice %48 {offsets = [0, 64], sizes = [16, 32], strides = [1, 1]} : vector<16x128xf32> to vector<16x32xf32>
    %52 = vector.extract_strided_slice %47 {offsets = [0, 96], sizes = [16, 32], strides = [1, 1]} : vector<16x128xf32> to vector<16x32xf32>
    %53 = arith.mulf %50, %39 : vector<16x32xf32>
    %54 = arith.mulf %49, %51 : vector<16x32xf32>
    %55 = arith.addf %53, %54 : vector<16x32xf32>
    %56 = math.tanh %55 : vector<16x32xf32>
    %57 = arith.mulf %52, %56 : vector<16x32xf32>
    %58 = vector.extract_strided_slice %37 {offsets = [16, 0], sizes = [16, 128], strides = [1, 1]} : vector<96x128xf32> to vector<16x128xf32>
    %cst_27 = arith.constant dense<0.000000e+00> : vector<16x128xf32>
    %59 = tpu.matmul %57, %33, %cst_27 {dimension_numbers = #tpu.dot_dimension_numbers<[1], [0], [0], [1], [0, 0, 1, 1], [], []>} : vector<16x32xf32>, vector<32x128xf32>, vector<16x128xf32> -> vector<16x128xf32>
    %60 = arith.addf %58, %59 : vector<16x128xf32>
    %61 = arith.negf %60 : vector<16x128xf32>
    %62 = math.exp %61 : vector<16x128xf32>
    %cst_28 = arith.constant 1.000000e+00 : f32
    %63 = vector.broadcast %cst_28 : f32 to vector<16x128xf32>
    %64 = arith.addf %63, %62 : vector<16x128xf32>
    %65 = arith.divf %63, %64 : vector<16x128xf32>
    %66 = math.tanh %60 : vector<16x128xf32>
    %67 = vector.extract_strided_slice %65 {offsets = [0, 0], sizes = [16, 32], strides = [1, 1]} : vector<16x128xf32> to vector<16x32xf32>
    %68 = vector.extract_strided_slice %65 {offsets = [0, 32], sizes = [16, 32], strides = [1, 1]} : vector<16x128xf32> to vector<16x32xf32>
    %69 = vector.extract_strided_slice %66 {offsets = [0, 64], sizes = [16, 32], strides = [1, 1]} : vector<16x128xf32> to vector<16x32xf32>
    %70 = vector.extract_strided_slice %65 {offsets = [0, 96], sizes = [16, 32], strides = [1, 1]} : vector<16x128xf32> to vector<16x32xf32>
    %71 = arith.mulf %68, %55 : vector<16x32xf32>
    %72 = arith.mulf %67, %69 : vector<16x32xf32>
    %73 = arith.addf %71, %72 : vector<16x32xf32>
    %74 = math.tanh %73 : vector<16x32xf32>
    %75 = arith.mulf %70, %74 : vector<16x32xf32>
    %76 = vector.extract_strided_slice %37 {offsets = [32, 0], sizes = [16, 128], strides = [1, 1]} : vector<96x128xf32> to vector<16x128xf32>
    %cst_29 = arith.constant dense<0.000000e+00> : vector<16x128xf32>
    %77 = tpu.matmul %75, %33, %cst_29 {dimension_numbers = #tpu.dot_dimension_numbers<[1], [0], [0], [1], [0, 0, 1, 1], [], []>} : vector<16x32xf32>, vector<32x128xf32>, vector<16x128xf32> -> vector<16x128xf32>
    %78 = arith.addf %76, %77 : vector<16x128xf32>
    %79 = arith.negf %78 : vector<16x128xf32>
    %80 = math.exp %79 : vector<16x128xf32>
    %cst_30 = arith.constant 1.000000e+00 : f32
    %81 = vector.broadcast %cst_30 : f32 to vector<16x128xf32>
    %82 = arith.addf %81, %80 : vector<16x128xf32>
    %83 = arith.divf %81, %82 : vector<16x128xf32>
    %84 = math.tanh %78 : vector<16x128xf32>
    %85 = vector.extract_strided_slice %83 {offsets = [0, 0], sizes = [16, 32], strides = [1, 1]} : vector<16x128xf32> to vector<16x32xf32>
    %86 = vector.extract_strided_slice %83 {offsets = [0, 32], sizes = [16, 32], strides = [1, 1]} : vector<16x128xf32> to vector<16x32xf32>
    %87 = vector.extract_strided_slice %84 {offsets = [0, 64], sizes = [16, 32], strides = [1, 1]} : vector<16x128xf32> to vector<16x32xf32>
    %88 = vector.extract_strided_slice %83 {offsets = [0, 96], sizes = [16, 32], strides = [1, 1]} : vector<16x128xf32> to vector<16x32xf32>
    %89 = arith.mulf %86, %73 : vector<16x32xf32>
    %90 = arith.mulf %85, %87 : vector<16x32xf32>
    %91 = arith.addf %89, %90 : vector<16x32xf32>
    %92 = math.tanh %91 : vector<16x32xf32>
    %93 = arith.mulf %88, %92 : vector<16x32xf32>
    %94 = vector.extract_strided_slice %37 {offsets = [48, 0], sizes = [16, 128], strides = [1, 1]} : vector<96x128xf32> to vector<16x128xf32>
    %cst_31 = arith.constant dense<0.000000e+00> : vector<16x128xf32>
    %95 = tpu.matmul %93, %33, %cst_31 {dimension_numbers = #tpu.dot_dimension_numbers<[1], [0], [0], [1], [0, 0, 1, 1], [], []>} : vector<16x32xf32>, vector<32x128xf32>, vector<16x128xf32> -> vector<16x128xf32>
    %96 = arith.addf %94, %95 : vector<16x128xf32>
    %97 = arith.negf %96 : vector<16x128xf32>
    %98 = math.exp %97 : vector<16x128xf32>
    %cst_32 = arith.constant 1.000000e+00 : f32
    %99 = vector.broadcast %cst_32 : f32 to vector<16x128xf32>
    %100 = arith.addf %99, %98 : vector<16x128xf32>
    %101 = arith.divf %99, %100 : vector<16x128xf32>
    %102 = math.tanh %96 : vector<16x128xf32>
    %103 = vector.extract_strided_slice %101 {offsets = [0, 0], sizes = [16, 32], strides = [1, 1]} : vector<16x128xf32> to vector<16x32xf32>
    %104 = vector.extract_strided_slice %101 {offsets = [0, 32], sizes = [16, 32], strides = [1, 1]} : vector<16x128xf32> to vector<16x32xf32>
    %105 = vector.extract_strided_slice %102 {offsets = [0, 64], sizes = [16, 32], strides = [1, 1]} : vector<16x128xf32> to vector<16x32xf32>
    %106 = vector.extract_strided_slice %101 {offsets = [0, 96], sizes = [16, 32], strides = [1, 1]} : vector<16x128xf32> to vector<16x32xf32>
    %107 = arith.mulf %104, %91 : vector<16x32xf32>
    %108 = arith.mulf %103, %105 : vector<16x32xf32>
    %109 = arith.addf %107, %108 : vector<16x32xf32>
    %110 = math.tanh %109 : vector<16x32xf32>
    %111 = arith.mulf %106, %110 : vector<16x32xf32>
    %112 = vector.extract_strided_slice %37 {offsets = [64, 0], sizes = [16, 128], strides = [1, 1]} : vector<96x128xf32> to vector<16x128xf32>
    %cst_33 = arith.constant dense<0.000000e+00> : vector<16x128xf32>
    %113 = tpu.matmul %111, %33, %cst_33 {dimension_numbers = #tpu.dot_dimension_numbers<[1], [0], [0], [1], [0, 0, 1, 1], [], []>} : vector<16x32xf32>, vector<32x128xf32>, vector<16x128xf32> -> vector<16x128xf32>
    %114 = arith.addf %112, %113 : vector<16x128xf32>
    %115 = arith.negf %114 : vector<16x128xf32>
    %116 = math.exp %115 : vector<16x128xf32>
    %cst_34 = arith.constant 1.000000e+00 : f32
    %117 = vector.broadcast %cst_34 : f32 to vector<16x128xf32>
    %118 = arith.addf %117, %116 : vector<16x128xf32>
    %119 = arith.divf %117, %118 : vector<16x128xf32>
    %120 = math.tanh %114 : vector<16x128xf32>
    %121 = vector.extract_strided_slice %119 {offsets = [0, 0], sizes = [16, 32], strides = [1, 1]} : vector<16x128xf32> to vector<16x32xf32>
    %122 = vector.extract_strided_slice %119 {offsets = [0, 32], sizes = [16, 32], strides = [1, 1]} : vector<16x128xf32> to vector<16x32xf32>
    %123 = vector.extract_strided_slice %120 {offsets = [0, 64], sizes = [16, 32], strides = [1, 1]} : vector<16x128xf32> to vector<16x32xf32>
    %124 = vector.extract_strided_slice %119 {offsets = [0, 96], sizes = [16, 32], strides = [1, 1]} : vector<16x128xf32> to vector<16x32xf32>
    %125 = arith.mulf %122, %109 : vector<16x32xf32>
    %126 = arith.mulf %121, %123 : vector<16x32xf32>
    %127 = arith.addf %125, %126 : vector<16x32xf32>
    %128 = math.tanh %127 : vector<16x32xf32>
    %129 = arith.mulf %124, %128 : vector<16x32xf32>
    %130 = vector.extract_strided_slice %37 {offsets = [80, 0], sizes = [16, 128], strides = [1, 1]} : vector<96x128xf32> to vector<16x128xf32>
    %cst_35 = arith.constant dense<0.000000e+00> : vector<16x128xf32>
    %131 = tpu.matmul %129, %33, %cst_35 {dimension_numbers = #tpu.dot_dimension_numbers<[1], [0], [0], [1], [0, 0, 1, 1], [], []>} : vector<16x32xf32>, vector<32x128xf32>, vector<16x128xf32> -> vector<16x128xf32>
    %132 = arith.addf %130, %131 : vector<16x128xf32>
    %133 = arith.negf %132 : vector<16x128xf32>
    %134 = math.exp %133 : vector<16x128xf32>
    %cst_36 = arith.constant 1.000000e+00 : f32
    %135 = vector.broadcast %cst_36 : f32 to vector<16x128xf32>
    %136 = arith.addf %135, %134 : vector<16x128xf32>
    %137 = arith.divf %135, %136 : vector<16x128xf32>
    %138 = math.tanh %132 : vector<16x128xf32>
    %139 = vector.extract_strided_slice %137 {offsets = [0, 0], sizes = [16, 32], strides = [1, 1]} : vector<16x128xf32> to vector<16x32xf32>
    %140 = vector.extract_strided_slice %137 {offsets = [0, 32], sizes = [16, 32], strides = [1, 1]} : vector<16x128xf32> to vector<16x32xf32>
    %141 = vector.extract_strided_slice %138 {offsets = [0, 64], sizes = [16, 32], strides = [1, 1]} : vector<16x128xf32> to vector<16x32xf32>
    %142 = vector.extract_strided_slice %137 {offsets = [0, 96], sizes = [16, 32], strides = [1, 1]} : vector<16x128xf32> to vector<16x32xf32>
    %143 = arith.mulf %140, %127 : vector<16x32xf32>
    %144 = arith.mulf %139, %141 : vector<16x32xf32>
    %145 = arith.addf %143, %144 : vector<16x32xf32>
    %146 = math.tanh %145 : vector<16x32xf32>
    %147 = arith.mulf %142, %146 : vector<16x32xf32>
    %c328 = arith.constant 328 : index
    %c0_37 = arith.constant 0 : index
    %148 = vector.load %arg1[%c328, %c0_37] : memref<368x128xf32, #tpu.memory_space<vmem>>, vector<32x128xf32>
    %c360 = arith.constant 360 : index
    %c0_38 = arith.constant 0 : index
    %149 = vector.load %arg1[%c360, %c0_38] : memref<368x128xf32, #tpu.memory_space<vmem>>, vector<1x128xf32>
    %cst_39 = arith.constant dense<0.000000e+00> : vector<16x128xf32>
    %150 = tpu.matmul %147, %148, %cst_39 {dimension_numbers = #tpu.dot_dimension_numbers<[1], [0], [0], [1], [0, 0, 1, 1], [], []>} : vector<16x32xf32>, vector<32x128xf32>, vector<16x128xf32> -> vector<16x128xf32>
    %151 = vector.broadcast %149 : vector<1x128xf32> to vector<16x128xf32>
    %152 = arith.addf %150, %151 : vector<16x128xf32>
    %c0_40 = arith.constant 0 : index
    %c0_41 = arith.constant 0 : index
    %153 = vector.load %arg2[%c0_40, %c0_41] : memref<16x128xf32, #tpu.memory_space<vmem>>, vector<16x128xf32>
    tpu.vector_store %arg2[%c0_40, %c0_41], %152 {strides = array<i32>} : memref<16x128xf32, #tpu.memory_space<vmem>>, vector<16x128xf32>,
    return
  }
}

</mosaic_0001>

<llo_original>
// kernel: tpu_custom_call.1
$region0: #{tpu_custom_call.1}
  #allocation0 [shape = 'u32[]', space=smem, size = 0x4, offset = 0x4, fixed_abs, tag = 'smem constant byte address 0x4 - core index']
  #allocation1 [shape = 'u32[144,128]{1,0:T(1,128)}', space=vmem, size = 0x12000, scoped, tag = 'internal scratch']
  %s0 = inlined_call_operand.hbm [shape: bf16[96,96], index: 0, kind: input, shape index: {}]
  %s1 = inlined_call_operand.hbm [shape: f32[368,128], index: 1, kind: input, shape index: {}]
  %s2 = inlined_call_operand.hbm [shape: f32[16,128], index: 2, kind: output, shape index: {}]
  %s3 = sld [smem:[#allocation0]]
  $region26: #{tpu_custom_call.1} parent=0
    _
  %s5 = ssub.s32 1, %s3
  %s6 = scalar_select 0, %s5, %s3
  $region1: #{tpu_custom_call.1} parent=0
    #allocation2 [shape = 'u8[24576]{0}', space=vmem, size = 0x6000, scoped, tag = 'input window, operand 0, single buffered']
    #allocation3 [shape = 's32[1]{0}', space=sflag, size = 0x4, scoped, tag = 'scoped memory for tpu_custom_call.1']
    #allocation4 [shape = 's32[1]{0}', space=sflag, size = 0x4, scoped, tag = 'scoped memory for tpu_custom_call.1']
    #allocation5 [shape = 'u8[188416]{0}', space=vmem, size = 0x2e000, scoped, tag = 'input window, operand 1, single buffered']
    #allocation6 [shape = 's32[1]{0}', space=sflag, size = 0x4, scoped, tag = 'scoped memory for tpu_custom_call.1']
    #allocation7 [shape = 'u8[8192]{0}', space=vmem, size = 0x2000, scoped, tag = 'output window, operand 0, single buffered']
    %7 = vsyncpa [#allocation3], 0
    %8 = vsyncpa [#allocation6], 0
    %9 = vsyncpa [#allocation4], 0
    // Predicated region
    $region2: #{tpu_custom_call.1} parent=1 // pred_check
      _
    $region3: #{tpu_custom_call.1} parent=1 // pred_check_branch
      %11 = sbr.rel (0) target = $region5
    $region4: #{tpu_custom_call.1} parent=1 // pred_region
      %s13 = ssub.s32 768, 768
      %14 = vsyncadd [#allocation3], %s13
      %s15 = sshll.u32 [#allocation2], 4
      %s16 = int_to_ptr.vmem [resolvable:$true] %s15
      %21 = dma.hbm_to_vmem [thread:$0]  %s0, 768, %s16, [#allocation3], 64, 64, 4
    $region5: #{tpu_custom_call.1} parent=1 // pred_fallthru
      _
    // Predicated region
    $region6: #{tpu_custom_call.1} parent=1 // pred_check
      _
    $region7: #{tpu_custom_call.1} parent=1 // pred_check_branch
      %23 = sbr.rel (0) target = $region9
    $region8: #{tpu_custom_call.1} parent=1 // pred_region
      %s25 = ssub.s32 5888, 5888
      %26 = vsyncadd [#allocation6], %s25
      %s27 = sshll.u32 [#allocation5], 4
      %s28 = int_to_ptr.vmem [resolvable:$true] %s27
      %33 = dma.hbm_to_vmem [thread:$0]  %s1, 5888, %s28, [#allocation6], 128, 128, 8
    $region9: #{tpu_custom_call.1} parent=1 // pred_fallthru
      _
    // Predicated region
    $region10: #{tpu_custom_call.1} parent=1 // pred_check
      _
    $region11: #{tpu_custom_call.1} parent=1 // pred_check_branch
      %35 = sbr.rel (0) target = $region13
    $region12: #{tpu_custom_call.1} parent=1 // pred_region
      %36 = dma.done [#allocation3], 768
    $region13: #{tpu_custom_call.1} parent=1 // pred_fallthru
      _
    // Predicated region
    $region14: #{tpu_custom_call.1} parent=1 // pred_check
      _
    $region15: #{tpu_custom_call.1} parent=1 // pred_check_branch
      %38 = sbr.rel (0) target = $region17
    $region16: #{tpu_custom_call.1} parent=1 // pred_region
      %39 = dma.done [#allocation6], 5888
    $region17: #{tpu_custom_call.1} parent=1 // pred_fallthru
      _
    %v40 = vld [vmem:[#allocation2] sm:$0xf]
    %v41 = vld [vmem:[#allocation2 + $0x4] sm:$0xf]
    %v42 = vld [vmem:[#allocation2 + $0x8] sm:$0xf]
    %v43 = vld [vmem:[#allocation2 + $0xc] sm:$0xf]
    %v44 = vld [vmem:[#allocation2 + $0x10] sm:$0xf]
    %v45 = vld [vmem:[#allocation2 + $0x14] sm:$0xf]
    %v46 = vld [vmem:[#allocation2 + $0x18] sm:$0xf]
    %v47 = vld [vmem:[#allocation2 + $0x1c] sm:$0xf]
    %v48 = vld [vmem:[#allocation2 + $0x20] sm:$0xf]
    %v49 = vld [vmem:[#allocation2 + $0x24] sm:$0xf]
    %v50 = vld [vmem:[#allocation2 + $0x28] sm:$0xf]
    %v51 = vld [vmem:[#allocation2 + $0x2c] sm:$0xf]
    %v52 = vunpack.c.l.bf16 %v40
    %v53 = vunpack.c.l.bf16 %v41
    %v54 = vunpack.c.l.bf16 %v42
    %v55 = vunpack.c.l.bf16 %v43
    %v56 = vunpack.c.l.bf16 %v44
    %v57 = vunpack.c.l.bf16 %v45
    %v58 = vunpack.c.l.bf16 %v46
    %v59 = vunpack.c.l.bf16 %v47
    %v60 = vunpack.c.l.bf16 %v48
    %v61 = vunpack.c.l.bf16 %v49
    %v62 = vunpack.c.l.bf16 %v50
    %v63 = vunpack.c.l.bf16 %v51
    %v64 = vld [vmem:[#allocation5] sm:$0xff]
    %v65 = vld [vmem:[#allocation5 + $0x8] sm:$0xff]
    %v66 = vld [vmem:[#allocation5 + $0x10] sm:$0xff]
    %v67 = vld [vmem:[#allocation5 + $0x18] sm:$0xff]
    %v68 = vld [vmem:[#allocation5 + $0x20] sm:$0xff]
    %v69 = vld [vmem:[#allocation5 + $0x28] sm:$0xff]
    %v70 = vld [vmem:[#allocation5 + $0x30] sm:$0xff]
    %v71 = vld [vmem:[#allocation5 + $0x38] sm:$0xff]
    %v72 = vld [vmem:[#allocation5 + $0x40] sm:$0xff]
    %v73 = vld [vmem:[#allocation5 + $0x48] sm:$0xff]
    %v74 = vld [vmem:[#allocation5 + $0x50] sm:$0xff]
    %v75 = vld [vmem:[#allocation5 + $0x58] sm:$0xff]
    %v76 = vld [vmem:[#allocation5 + $0x60] sm:$0xff]
    %v77 = vld [vmem:[#allocation5 + $0x68] sm:$0x1]
    %v78 = vlaneseq
    %v79 = vshrl.u32 %v78, 7
    %v80 = vsub.s32 0, %v79
    %v81 = vrot.slane %v77, %v80
    %vm82 = vcmask 64512
    %v84 = vsel %vm82, %v64, 0
    %v87 = vsel %vm82, %v65, 0
    %v90 = vsel %vm82, %v66, 0
    %v93 = vsel %vm82, %v67, 0
    %v96 = vsel %vm82, %v68, 0
    %v99 = vsel %vm82, %v69, 0
    %v102 = vsel %vm82, %v70, 0
    %v105 = vsel %vm82, %v71, 0
    %v108 = vsel %vm82, %v72, 0
    %v111 = vsel %vm82, %v73, 0
    %v114 = vsel %vm82, %v74, 0
    %v117 = vsel %vm82, %v75, 0
    %119 = vmatprep.subr.mxu0 0.0
    %120 = vmatpush1.msra.mxu0 %v76
    %121 = vmatprep.subr.mxu0 0.0
    %122 = vmatpush1.msra.mxu0 0.0
    %123 = vmatprep.subr.mxu0 0.0
    %124 = vmatpush1.msra.mxu0 0.0
    %125 = vmatprep.subr.mxu0 0.0
    %126 = vmatpush1.msra.mxu0 0.0
    %127 = vmatprep.subr.mxu0 0.0
    %128 = vmatpush1.msra.mxu0 0.0
    %129 = vmatprep.subr.mxu0 0.0
    %130 = vmatpush1.msra.mxu0 0.0
    %131 = vmatprep.subr.mxu0 0.0
    %132 = vmatpush1.msra.mxu0 0.0
    %133 = vmatprep.subr.mxu0 0.0
    %134 = vmatpush1.msra.mxu0 0.0
    %135 = vmatprep.subr.mxu0 0.0
    %136 = vmatpush1.msra.mxu0 0.0
    %137 = vmatprep.subr.mxu0 0.0
    %138 = vmatpush1.msra.mxu0 0.0
    %139 = vmatprep.subr.mxu0 0.0
    %140 = vmatpush1.msra.mxu0 0.0
    %141 = vmatprep.subr.mxu0 0.0
    %142 = vmatpush1.msra.mxu0 0.0
    %143 = vmatprep.subr.mxu0 0.0
    %144 = vmatpush1.msra.mxu0 0.0
    %145 = vmatprep.subr.mxu0 0.0
    %146 = vmatpush1.msra.mxu0 0.0
    %147 = vmatprep.subr.mxu0 0.0
    %148 = vmatpush1.msra.mxu0 0.0
    %149 = vmatprep.subr.mxu0 0.0
    %150 = vmatpush1.msra.mxu0 0.0
    %151 = vmatprep.subr.mxu0 0.0
    %152 = vmatpush1.msra.mxu0 0.0
    %153 = vmatprep.subr.mxu0 0.0
    %154 = vmatpush1.msra.mxu0 0.0
    %155 = vmatprep.subr.mxu0 0.0
    %156 = vmatpush1.msra.mxu0 0.0
    %157 = vmatprep.subr.mxu0 0.0
    %158 = vmatpush1.msra.mxu0 0.0
    %159 = vmatprep.subr.mxu0 0.0
    %160 = vmatpush1.msra.mxu0 0.0
    %161 = vmatprep.subr.mxu0 0.0
    %162 = vmatpush1.msra.mxu0 0.0
    %163 = vmatprep.subr.mxu0 0.0
    %164 = vmatpush1.msra.mxu0 0.0
    %165 = vmatprep.subr.mxu0 0.0
    %166 = vmatpush1.msra.mxu0 0.0
    %167 = vmatprep.subr.mxu0 0.0
    %168 = vmatpush1.msra.mxu0 0.0
    %169 = vmatprep.subr.mxu0 0.0
    %170 = vmatpush1.msra.mxu0 0.0
    %171 = vmatprep.subr.mxu0 0.0
    %172 = vmatpush1.msra.mxu0 0.0
    %173 = vmatprep.subr.mxu0 0.0
    %174 = vmatpush1.msra.mxu0 0.0
    %175 = vmatprep.subr.mxu0 0.0
    %176 = vmatpush1.msra.mxu0 0.0
    %177 = vmatprep.subr.mxu0 0.0
    %178 = vmatpush1.msra.mxu0 0.0
    %179 = vmatprep.subr.mxu0 0.0
    %180 = vmatpush1.msra.mxu0 0.0
    %181 = vmatprep.subr.mxu0 0.0
    %182 = vmatpush1.msra.mxu0 0.0
    %183 = vmatprep.mubr.f32.mxu0 0.0
    %184 = vmatmul.mubr.f32.gmra.mrb[0].mxu0 %v84
    %v185 = vpop.f32.mrb[0].mxu0
    %v186 = vadd.f32 %v81, %v185
    %v187 = vpop.f32.mrb[0].mxu0
    %188 = vmatprep.mubr.f32.mxu0 0.0
    %189 = vmatmul.mubr.f32.gmra.mrb[0].mxu0 %v87
    %v190 = vpop.f32.mrb[0].mxu0
    %v191 = vadd.f32 %v81, %v190
    %v192 = vpop.f32.mrb[0].mxu0
    %193 = vmatprep.mubr.f32.mxu0 0.0
    %194 = vmatmul.mubr.f32.gmra.mrb[0].mxu0 %v90
    %v195 = vpop.f32.mrb[0].mxu0
    %v196 = vadd.f32 %v81, %v195
    %v197 = vpop.f32.mrb[0].mxu0
    %198 = vmatprep.mubr.f32.mxu0 0.0
    %199 = vmatmul.mubr.f32.gmra.mrb[0].mxu0 %v93
    %v200 = vpop.f32.mrb[0].mxu0
    %v201 = vadd.f32 %v81, %v200
    %v202 = vpop.f32.mrb[0].mxu0
    %203 = vmatprep.mubr.f32.mxu0 0.0
    %204 = vmatmul.mubr.f32.gmra.mrb[0].mxu0 %v96
    %v205 = vpop.f32.mrb[0].mxu0
    %v206 = vadd.f32 %v81, %v205
    %v207 = vpop.f32.mrb[0].mxu0
    %208 = vmatprep.mubr.f32.mxu0 0.0
    %209 = vmatmul.mubr.f32.gmra.mrb[0].mxu0 %v99
    %v210 = vpop.f32.mrb[0].mxu0
    %v211 = vadd.f32 %v81, %v210
    %v212 = vpop.f32.mrb[0].mxu0
    %213 = vmatprep.mubr.f32.mxu0 0.0
    %214 = vmatmul.mubr.f32.gmra.mrb[0].mxu0 %v102
    %v215 = vpop.f32.mrb[0].mxu0
    %v216 = vadd.f32 %v81, %v215
    %v217 = vpop.f32.mrb[0].mxu0
    %218 = vmatprep.mubr.f32.mxu0 0.0
    %219 = vmatmul.mubr.f32.gmra.mrb[0].mxu0 %v105
    %v220 = vpop.f32.mrb[0].mxu0
    %v221 = vadd.f32 %v81, %v220
    %v222 = vpop.f32.mrb[0].mxu0
    %223 = vmatprep.mubr.f32.mxu0 0.0
    %224 = vmatmul.mubr.f32.gmra.mrb[0].mxu0 %v108
    %v225 = vpop.f32.mrb[0].mxu0
    %v226 = vadd.f32 %v81, %v225
    %v227 = vpop.f32.mrb[0].mxu0
    %228 = vmatprep.mubr.f32.mxu0 0.0
    %229 = vmatmul.mubr.f32.gmra.mrb[0].mxu0 %v111
    %v230 = vpop.f32.mrb[0].mxu0
    %v231 = vadd.f32 %v81, %v230
    %v232 = vpop.f32.mrb[0].mxu0
    %233 = vmatprep.mubr.f32.mxu0 0.0
    %234 = vmatmul.mubr.f32.gmra.mrb[0].mxu0 %v114
    %v235 = vpop.f32.mrb[0].mxu0
    %v236 = vadd.f32 %v81, %v235
    %v237 = vpop.f32.mrb[0].mxu0
    %238 = vmatprep.mubr.f32.mxu0 0.0
    %239 = vmatmul.mubr.f32.gmra.mrb[0].mxu0 %v117
    %v240 = vpop.f32.mrb[0].mxu0
    %v241 = vadd.f32 %v81, %v240
    %v242 = vpop.f32.mrb[0].mxu0
    %243 = vdwg.mxu0
    %v244 = vld [vmem:[#allocation5 + $0x70] sm:$0xff]
    %v245 = vld [vmem:[#allocation5 + $0x78] sm:$0xff]
    %v246 = vld [vmem:[#allocation5 + $0x80] sm:$0xff]
    %v247 = vld [vmem:[#allocation5 + $0x88] sm:$0xff]
    %v248 = vld [vmem:[#allocation5 + $0xb0] sm:$0xff]
    %v249 = vld [vmem:[#allocation5 + $0xb8] sm:$0xff]
    %v250 = vld [vmem:[#allocation5 + $0xc0] sm:$0xff]
    %v251 = vld [vmem:[#allocation5 + $0xc8] sm:$0xff]
    %v252 = vld [vmem:[#allocation5 + $0xf0] sm:$0x1]
    %vm253 = vcmask 785408
    %v255 = vsel %vm253, %v52, 0
    %v258 = vsel %vm253, %v53, 0
    %v261 = vsel %vm253, %v54, 0
    %v264 = vsel %vm253, %v55, 0
    %v267 = vsel %vm253, %v56, 0
    %v270 = vsel %vm253, %v57, 0
    %v273 = vsel %vm253, %v58, 0
    %v276 = vsel %vm253, %v59, 0
    %v279 = vsel %vm253, %v60, 0
    %v282 = vsel %vm253, %v61, 0
    %v285 = vsel %vm253, %v62, 0
    %v288 = vsel %vm253, %v63, 0
    %290 = vmatprep.subr.mxu0 0.0
    %291 = vmatpush1.msra.mxu0 %v186
    %292 = vmatprep.subr.mxu0 0.0
    %293 = vmatpush1.msra.mxu0 %v191
    %294 = vmatprep.subr.mxu0 0.0
    %295 = vmatpush1.msra.mxu0 %v196
    %296 = vmatprep.subr.mxu0 0.0
    %297 = vmatpush1.msra.mxu0 %v201
    %298 = vmatprep.subr.mxu0 0.0
    %299 = vmatpush1.msra.mxu0 %v206
    %300 = vmatprep.subr.mxu0 0.0
    %301 = vmatpush1.msra.mxu0 %v211
    %302 = vmatprep.subr.mxu0 0.0
    %303 = vmatpush1.msra.mxu0 %v216
    %304 = vmatprep.subr.mxu0 0.0
    %305 = vmatpush1.msra.mxu0 %v221
    %306 = vmatprep.subr.mxu0 0.0
    %307 = vmatpush1.msra.mxu0 %v226
    %308 = vmatprep.subr.mxu0 0.0
    %309 = vmatpush1.msra.mxu0 %v231
    %310 = vmatprep.subr.mxu0 0.0
    %311 = vmatpush1.msra.mxu0 %v236
    %312 = vmatprep.subr.mxu0 0.0
    %313 = vmatpush1.msra.mxu0 %v241
    %314 = vmatprep.subr.mxu0 0.0
    %315 = vmatpush1.msra.mxu0 0.0
    %316 = vmatprep.subr.mxu0 0.0
    %317 = vmatpush1.msra.mxu0 0.0
    %318 = vmatprep.subr.mxu0 0.0
    %319 = vmatpush1.msra.mxu0 0.0
    %320 = vmatprep.subr.mxu0 0.0
    %321 = vmatpush1.msra.mxu0 0.0
    %322 = vmatprep.subr.mxu0 0.0
    %323 = vmatpush1.msra.mxu0 0.0
    %324 = vmatprep.subr.mxu0 0.0
    %325 = vmatpush1.msra.mxu0 0.0
    %326 = vmatprep.subr.mxu0 0.0
    %327 = vmatpush1.msra.mxu0 0.0
    %328 = vmatprep.subr.mxu0 0.0
    %329 = vmatpush1.msra.mxu0 0.0
    %330 = vmatprep.subr.mxu0 0.0
    %331 = vmatpush1.msra.mxu0 0.0
    %332 = vmatprep.subr.mxu0 0.0
    %333 = vmatpush1.msra.mxu0 0.0
    %334 = vmatprep.subr.mxu0 0.0
    %335 = vmatpush1.msra.mxu0 0.0
    %336 = vmatprep.subr.mxu0 0.0
    %337 = vmatpush1.msra.mxu0 0.0
    %338 = vmatprep.subr.mxu0 0.0
    %339 = vmatpush1.msra.mxu0 0.0
    %340 = vmatprep.subr.mxu0 0.0
    %341 = vmatpush1.msra.mxu0 0.0
    %342 = vmatprep.subr.mxu0 0.0
    %343 = vmatpush1.msra.mxu0 0.0
    %344 = vmatprep.subr.mxu0 0.0
    %345 = vmatpush1.msra.mxu0 0.0
    %346 = vmatprep.subr.mxu0 0.0
    %347 = vmatpush1.msra.mxu0 0.0
    %348 = vmatprep.subr.mxu0 0.0
    %349 = vmatpush1.msra.mxu0 0.0
    %350 = vmatprep.subr.mxu0 0.0
    %351 = vmatpush1.msra.mxu0 0.0
    %352 = vmatprep.subr.mxu0 0.0
    %353 = vmatpush1.msra.mxu0 0.0
    %354 = vmatprep.mubr.f32.mxu0 0.0
    %355 = vmatmul.mubr.f32.gmra.mrb[0].mxu0 %v255
    %v356 = vpop.f32.mrb[0].mxu0
    %v357 = vadd.f32 0.0, %v356
    %v358 = vpop.f32.mrb[0].mxu0
    %359 = vmatprep.mubr.f32.mxu0 0.0
    %360 = vmatmul.mubr.f32.gmra.mrb[0].mxu0 %v258
    %v361 = vpop.f32.mrb[0].mxu0
    %v362 = vadd.f32 0.0, %v361
    %v363 = vpop.f32.mrb[0].mxu0
    %364 = vmatprep.mubr.f32.mxu0 0.0
    %365 = vmatmul.mubr.f32.gmra.mrb[0].mxu0 %v261
    %v366 = vpop.f32.mrb[0].mxu0
    %v367 = vadd.f32 0.0, %v366
    %v368 = vpop.f32.mrb[0].mxu0
    %369 = vmatprep.mubr.f32.mxu0 0.0
    %370 = vmatmul.mubr.f32.gmra.mrb[0].mxu0 %v264
    %v371 = vpop.f32.mrb[0].mxu0
    %v372 = vadd.f32 0.0, %v371
    %v373 = vpop.f32.mrb[0].mxu0
    %374 = vmatprep.mubr.f32.mxu0 0.0
    %375 = vmatmul.mubr.f32.gmra.mrb[0].mxu0 %v267
    %v376 = vpop.f32.mrb[0].mxu0
    %v377 = vadd.f32 0.0, %v376
    %v378 = vpop.f32.mrb[0].mxu0
    %379 = vmatprep.mubr.f32.mxu0 0.0
    %380 = vmatmul.mubr.f32.gmra.mrb[0].mxu0 %v270
    %v381 = vpop.f32.mrb[0].mxu0
    %v382 = vadd.f32 0.0, %v381
    %v383 = vpop.f32.mrb[0].mxu0
    %384 = vmatprep.mubr.f32.mxu0 0.0
    %385 = vmatmul.mubr.f32.gmra.mrb[0].mxu0 %v273
    %v386 = vpop.f32.mrb[0].mxu0
    %v387 = vadd.f32 0.0, %v386
    %v388 = vpop.f32.mrb[0].mxu0
    %389 = vmatprep.mubr.f32.mxu0 0.0
    %390 = vmatmul.mubr.f32.gmra.mrb[0].mxu0 %v276
    %v391 = vpop.f32.mrb[0].mxu0
    %v392 = vadd.f32 0.0, %v391
    %v393 = vpop.f32.mrb[0].mxu0
    %394 = vmatprep.mubr.f32.mxu0 0.0
    %395 = vmatmul.mubr.f32.gmra.mrb[0].mxu0 %v279
    %v396 = vpop.f32.mrb[0].mxu0
    %v397 = vadd.f32 0.0, %v396
    %v398 = vpop.f32.mrb[0].mxu0
    %399 = vmatprep.mubr.f32.mxu0 0.0
    %400 = vmatmul.mubr.f32.gmra.mrb[0].mxu0 %v282
    %v401 = vpop.f32.mrb[0].mxu0
    %v402 = vadd.f32 0.0, %v401
    %v403 = vpop.f32.mrb[0].mxu0
    %404 = vmatprep.mubr.f32.mxu0 0.0
    %405 = vmatmul.mubr.f32.gmra.mrb[0].mxu0 %v285
    %v406 = vpop.f32.mrb[0].mxu0
    %v407 = vadd.f32 0.0, %v406
    %v408 = vpop.f32.mrb[0].mxu0
    %409 = vmatprep.mubr.f32.mxu0 0.0
    %410 = vmatmul.mubr.f32.gmra.mrb[0].mxu0 %v288
    %v411 = vpop.f32.mrb[0].mxu0
    %v412 = vadd.f32 0.0, %v411
    %v413 = vpop.f32.mrb[0].mxu0
    %414 = vdwg.mxu0
    %vm415 = vcmask 261120
    %v417 = vsel %vm415, %v357, 0
    %v420 = vsel %vm415, %v362, 0
    %v423 = vsel %vm415, %v367, 0
    %v426 = vsel %vm415, %v372, 0
    %v429 = vsel %vm415, %v377, 0
    %v432 = vsel %vm415, %v382, 0
    %v435 = vsel %vm415, %v387, 0
    %v438 = vsel %vm415, %v392, 0
    %v441 = vsel %vm415, %v397, 0
    %v444 = vsel %vm415, %v402, 0
    %v447 = vsel %vm415, %v407, 0
    %v450 = vsel %vm415, %v412, 0
    %452 = vmatprep.subr.mxu0 0.0
    %453 = vmatpush1.msra.mxu0 %v248
    %454 = vmatprep.subr.mxu0 0.0
    %455 = vmatpush1.msra.mxu0 %v249
    %456 = vmatprep.subr.mxu0 0.0
    %457 = vmatpush1.msra.mxu0 %v250
    %458 = vmatprep.subr.mxu0 0.0
    %459 = vmatpush1.msra.mxu0 %v251
    %460 = vmatprep.subr.mxu0 0.0
    %461 = vmatpush1.msra.mxu0 0.0
    %462 = vmatprep.subr.mxu0 0.0
    %463 = vmatpush1.msra.mxu0 0.0
    %464 = vmatprep.subr.mxu0 0.0
    %465 = vmatpush1.msra.mxu0 0.0
    %466 = vmatprep.subr.mxu0 0.0
    %467 = vmatpush1.msra.mxu0 0.0
    %468 = vmatprep.subr.mxu0 0.0
    %469 = vmatpush1.msra.mxu0 0.0
    %470 = vmatprep.subr.mxu0 0.0
    %471 = vmatpush1.msra.mxu0 0.0
    %472 = vmatprep.subr.mxu0 0.0
    %473 = vmatpush1.msra.mxu0 0.0
    %474 = vmatprep.subr.mxu0 0.0
    %475 = vmatpush1.msra.mxu0 0.0
    %476 = vmatprep.subr.mxu0 0.0
    %477 = vmatpush1.msra.mxu0 0.0
    %478 = vmatprep.subr.mxu0 0.0
    %479 = vmatpush1.msra.mxu0 0.0
    %480 = vmatprep.subr.mxu0 0.0
    %481 = vmatpush1.msra.mxu0 0.0
    %482 = vmatprep.subr.mxu0 0.0
    %483 = vmatpush1.msra.mxu0 0.0
    %484 = vmatprep.subr.mxu0 0.0
    %485 = vmatpush1.msra.mxu0 0.0
    %486 = vmatprep.subr.mxu0 0.0
    %487 = vmatpush1.msra.mxu0 0.0
    %488 = vmatprep.subr.mxu0 0.0
    %489 = vmatpush1.msra.mxu0 0.0
    %490 = vmatprep.subr.mxu0 0.0
    %491 = vmatpush1.msra.mxu0 0.0
    %492 = vmatprep.subr.mxu0 0.0
    %493 = vmatpush1.msra.mxu0 0.0
    %494 = vmatprep.subr.mxu0 0.0
    %495 = vmatpush1.msra.mxu0 0.0
    %496 = vmatprep.subr.mxu0 0.0
    %497 = vmatpush1.msra.mxu0 0.0
    %498 = vmatprep.subr.mxu0 0.0
    %499 = vmatpush1.msra.mxu0 0.0
    %500 = vmatprep.subr.mxu0 0.0
    %501 = vmatpush1.msra.mxu0 0.0
    %502 = vmatprep.subr.mxu0 0.0
    %503 = vmatpush1.msra.mxu0 0.0
    %504 = vmatprep.subr.mxu0 0.0
    %505 = vmatpush1.msra.mxu0 0.0
    %506 = vmatprep.subr.mxu0 0.0
    %507 = vmatpush1.msra.mxu0 0.0
    %508 = vmatprep.subr.mxu0 0.0
    %509 = vmatpush1.msra.mxu0 0.0
    %510 = vmatprep.subr.mxu0 0.0
    %511 = vmatpush1.msra.mxu0 0.0
    %512 = vmatprep.subr.mxu0 0.0
    %513 = vmatpush1.msra.mxu0 0.0
    %514 = vmatprep.subr.mxu0 0.0
    %515 = vmatpush1.msra.mxu0 0.0
    %516 = vmatprep.mubr.f32.mxu0 0.0
    %517 = vmatmul.mubr.f32.gmra.mrb[0].mxu0 %v417
    %v518 = vpop.f32.mrb[0].mxu0
    %v519 = vadd.f32 0.0, %v518
    %v520 = vpop.f32.mrb[0].mxu0
    %521 = vmatprep.mubr.f32.mxu0 0.0
    %522 = vmatmul.mubr.f32.gmra.mrb[0].mxu0 %v420
    %v523 = vpop.f32.mrb[0].mxu0
    %v524 = vadd.f32 0.0, %v523
    %v525 = vpop.f32.mrb[0].mxu0
    %526 = vmatprep.mubr.f32.mxu0 0.0
    %527 = vmatmul.mubr.f32.gmra.mrb[0].mxu0 %v423
    %v528 = vpop.f32.mrb[0].mxu0
    %v529 = vadd.f32 0.0, %v528
    %v530 = vpop.f32.mrb[0].mxu0
    %531 = vmatprep.mubr.f32.mxu0 0.0
    %532 = vmatmul.mubr.f32.gmra.mrb[0].mxu0 %v426
    %v533 = vpop.f32.mrb[0].mxu0
    %v534 = vadd.f32 0.0, %v533
    %v535 = vpop.f32.mrb[0].mxu0
    %536 = vmatprep.mubr.f32.mxu0 0.0
    %537 = vmatmul.mubr.f32.gmra.mrb[0].mxu0 %v429
    %v538 = vpop.f32.mrb[0].mxu0
    %v539 = vadd.f32 0.0, %v538
    %v540 = vpop.f32.mrb[0].mxu0
    %541 = vmatprep.mubr.f32.mxu0 0.0
    %542 = vmatmul.mubr.f32.gmra.mrb[0].mxu0 %v432
    %v543 = vpop.f32.mrb[0].mxu0
    %v544 = vadd.f32 0.0, %v543
    %v545 = vpop.f32.mrb[0].mxu0
    %546 = vmatprep.mubr.f32.mxu0 0.0
    %547 = vmatmul.mubr.f32.gmra.mrb[0].mxu0 %v435
    %v548 = vpop.f32.mrb[0].mxu0
    %v549 = vadd.f32 0.0, %v548
    %v550 = vpop.f32.mrb[0].mxu0
    %551 = vmatprep.mubr.f32.mxu0 0.0
    %552 = vmatmul.mubr.f32.gmra.mrb[0].mxu0 %v438
    %v553 = vpop.f32.mrb[0].mxu0
    %v554 = vadd.f32 0.0, %v553
    %v555 = vpop.f32.mrb[0].mxu0
    %556 = vmatprep.mubr.f32.mxu0 0.0
    %557 = vmatmul.mubr.f32.gmra.mrb[0].mxu0 %v441
    %v558 = vpop.f32.mrb[0].mxu0
    %v559 = vadd.f32 0.0, %v558
    %v560 = vpop.f32.mrb[0].mxu0
    %561 = vmatprep.mubr.f32.mxu0 0.0
    %562 = vmatmul.mubr.f32.gmra.mrb[0].mxu0 %v444
    %v563 = vpop.f32.mrb[0].mxu0
    %v564 = vadd.f32 0.0, %v563
    %v565 = vpop.f32.mrb[0].mxu0
    %566 = vmatprep.mubr.f32.mxu0 0.0
    %567 = vmatmul.mubr.f32.gmra.mrb[0].mxu0 %v447
    %v568 = vpop.f32.mrb[0].mxu0
    %v569 = vadd.f32 0.0, %v568
    %v570 = vpop.f32.mrb[0].mxu0
    %571 = vmatprep.mubr.f32.mxu0 0.0
    %572 = vmatmul.mubr.f32.gmra.mrb[0].mxu0 %v450
    %v573 = vpop.f32.mrb[0].mxu0
    %v574 = vadd.f32 0.0, %v573
    %v575 = vpop.f32.mrb[0].mxu0
    %576 = vdwg.mxu0
    %v578 = vsel %vm415, %v186, 0
    %v581 = vsel %vm415, %v191, 0
    %v584 = vsel %vm415, %v196, 0
    %v587 = vsel %vm415, %v201, 0
    %v590 = vsel %vm415, %v206, 0
    %v593 = vsel %vm415, %v211, 0
    %v596 = vsel %vm415, %v216, 0
    %v599 = vsel %vm415, %v221, 0
    %v602 = vsel %vm415, %v226, 0
    %v605 = vsel %vm415, %v231, 0
    %v608 = vsel %vm415, %v236, 0
    %v611 = vsel %vm415, %v241, 0
    %613 = vmatprep.subr.mxu0 0.0
    %614 = vmatpush1.msra.mxu0 %v244
    %615 = vmatprep.subr.mxu0 0.0
    %616 = vmatpush1.msra.mxu0 %v245
    %617 = vmatprep.subr.mxu0 0.0
    %618 = vmatpush1.msra.mxu0 %v246
    %619 = vmatprep.subr.mxu0 0.0
    %620 = vmatpush1.msra.mxu0 %v247
    %621 = vmatprep.subr.mxu0 0.0
    %622 = vmatpush1.msra.mxu0 0.0
    %623 = vmatprep.subr.mxu0 0.0
    %624 = vmatpush1.msra.mxu0 0.0
    %625 = vmatprep.subr.mxu0 0.0
    %626 = vmatpush1.msra.mxu0 0.0
    %627 = vmatprep.subr.mxu0 0.0
    %628 = vmatpush1.msra.mxu0 0.0
    %629 = vmatprep.subr.mxu0 0.0
    %630 = vmatpush1.msra.mxu0 0.0
    %631 = vmatprep.subr.mxu0 0.0
    %632 = vmatpush1.msra.mxu0 0.0
    %633 = vmatprep.subr.mxu0 0.0
    %634 = vmatpush1.msra.mxu0 0.0
    %635 = vmatprep.subr.mxu0 0.0
    %636 = vmatpush1.msra.mxu0 0.0
    %637 = vmatprep.subr.mxu0 0.0
    %638 = vmatpush1.msra.mxu0 0.0
    %639 = vmatprep.subr.mxu0 0.0
    %640 = vmatpush1.msra.mxu0 0.0
    %641 = vmatprep.subr.mxu0 0.0
    %642 = vmatpush1.msra.mxu0 0.0
    %643 = vmatprep.subr.mxu0 0.0
    %644 = vmatpush1.msra.mxu0 0.0
    %645 = vmatprep.subr.mxu0 0.0
    %646 = vmatpush1.msra.mxu0 0.0
    %647 = vmatprep.subr.mxu0 0.0
    %648 = vmatpush1.msra.mxu0 0.0
    %649 = vmatprep.subr.mxu0 0.0
    %650 = vmatpush1.msra.mxu0 0.0
    %651 = vmatprep.subr.mxu0 0.0
    %652 = vmatpush1.msra.mxu0 0.0
    %653 = vmatprep.subr.mxu0 0.0
    %654 = vmatpush1.msra.mxu0 0.0
    %655 = vmatprep.subr.mxu0 0.0
    %656 = vmatpush1.msra.mxu0 0.0
    %657 = vmatprep.subr.mxu0 0.0
    %658 = vmatpush1.msra.mxu0 0.0
    %659 = vmatprep.subr.mxu0 0.0
    %660 = vmatpush1.msra.mxu0 0.0
    %661 = vmatprep.subr.mxu0 0.0
    %662 = vmatpush1.msra.mxu0 0.0
    %663 = vmatprep.subr.mxu0 0.0
    %664 = vmatpush1.msra.mxu0 0.0
    %665 = vmatprep.subr.mxu0 0.0
    %666 = vmatpush1.msra.mxu0 0.0
    %667 = vmatprep.subr.mxu0 0.0
    %668 = vmatpush1.msra.mxu0 0.0
    %669 = vmatprep.subr.mxu0 0.0
    %670 = vmatpush1.msra.mxu0 0.0
    %671 = vmatprep.subr.mxu0 0.0
    %672 = vmatpush1.msra.mxu0 0.0
    %673 = vmatprep.subr.mxu0 0.0
    %674 = vmatpush1.msra.mxu0 0.0
    %675 = vmatprep.subr.mxu0 0.0
    %676 = vmatpush1.msra.mxu0 0.0
    %677 = vmatprep.mubr.f32.mxu0 0.0
    %678 = vmatmul.mubr.f32.gmra.mrb[0].mxu0 %v578
    %v679 = vpop.f32.mrb[0].mxu0
    %v680 = vadd.f32 %v519, %v679
    %v681 = vpop.f32.mrb[0].mxu0
    %682 = vmatprep.mubr.f32.mxu0 0.0
    %683 = vmatmul.mubr.f32.gmra.mrb[0].mxu0 %v581
    %v684 = vpop.f32.mrb[0].mxu0
    %v685 = vadd.f32 %v524, %v684
    %v686 = vpop.f32.mrb[0].mxu0
    %687 = vmatprep.mubr.f32.mxu0 0.0
    %688 = vmatmul.mubr.f32.gmra.mrb[0].mxu0 %v584
    %v689 = vpop.f32.mrb[0].mxu0
    %v690 = vadd.f32 %v529, %v689
    %v691 = vpop.f32.mrb[0].mxu0
    %692 = vmatprep.mubr.f32.mxu0 0.0
    %693 = vmatmul.mubr.f32.gmra.mrb[0].mxu0 %v587
    %v694 = vpop.f32.mrb[0].mxu0
    %v695 = vadd.f32 %v534, %v694
    %v696 = vpop.f32.mrb[0].mxu0
    %697 = vmatprep.mubr.f32.mxu0 0.0
    %698 = vmatmul.mubr.f32.gmra.mrb[0].mxu0 %v590
    %v699 = vpop.f32.mrb[0].mxu0
    %v700 = vadd.f32 %v539, %v699
    %v701 = vpop.f32.mrb[0].mxu0
    %702 = vmatprep.mubr.f32.mxu0 0.0
    %703 = vmatmul.mubr.f32.gmra.mrb[0].mxu0 %v593
    %v704 = vpop.f32.mrb[0].mxu0
    %v705 = vadd.f32 %v544, %v704
    %v706 = vpop.f32.mrb[0].mxu0
    %707 = vmatprep.mubr.f32.mxu0 0.0
    %708 = vmatmul.mubr.f32.gmra.mrb[0].mxu0 %v596
    %v709 = vpop.f32.mrb[0].mxu0
    %v710 = vadd.f32 %v549, %v709
    %v711 = vpop.f32.mrb[0].mxu0
    %712 = vmatprep.mubr.f32.mxu0 0.0
    %713 = vmatmul.mubr.f32.gmra.mrb[0].mxu0 %v599
    %v714 = vpop.f32.mrb[0].mxu0
    %v715 = vadd.f32 %v554, %v714
    %v716 = vpop.f32.mrb[0].mxu0
    %717 = vmatprep.mubr.f32.mxu0 0.0
    %718 = vmatmul.mubr.f32.gmra.mrb[0].mxu0 %v602
    %v719 = vpop.f32.mrb[0].mxu0
    %v720 = vadd.f32 %v559, %v719
    %v721 = vpop.f32.mrb[0].mxu0
    %722 = vmatprep.mubr.f32.mxu0 0.0
    %723 = vmatmul.mubr.f32.gmra.mrb[0].mxu0 %v605
    %v724 = vpop.f32.mrb[0].mxu0
    %v725 = vadd.f32 %v564, %v724
    %v726 = vpop.f32.mrb[0].mxu0
    %727 = vmatprep.mubr.f32.mxu0 0.0
    %728 = vmatmul.mubr.f32.gmra.mrb[0].mxu0 %v608
    %v729 = vpop.f32.mrb[0].mxu0
    %v730 = vadd.f32 %v569, %v729
    %v731 = vpop.f32.mrb[0].mxu0
    %732 = vmatprep.mubr.f32.mxu0 0.0
    %733 = vmatmul.mubr.f32.gmra.mrb[0].mxu0 %v611
    %v734 = vpop.f32.mrb[0].mxu0
    %v735 = vadd.f32 %v574, %v734
    %v736 = vpop.f32.mrb[0].mxu0
    %737 = vdwg.mxu0
    %v738 = vlaneseq
    %v739 = vshrl.u32 %v738, 7
    %v740 = vsub.s32 0, %v739
    %v741 = vrot.slane %v252, %v740
    %v742 = vadd.f32 %v680, %v741
    %v743 = vadd.f32 %v685, %v741
    %v744 = vadd.f32 %v690, %v741
    %v745 = vadd.f32 %v695, %v741
    %v746 = vadd.f32 %v700, %v741
    %v747 = vadd.f32 %v705, %v741
    %v748 = vadd.f32 %v710, %v741
    %v749 = vadd.f32 %v715, %v741
    %v750 = vadd.f32 %v720, %v741
    %v751 = vadd.f32 %v725, %v741
    %v752 = vadd.f32 %v730, %v741
    %v753 = vadd.f32 %v735, %v741
    %v754 = vmax.f32 %v742, 0.0
    %v755 = vmax.f32 %v743, 0.0
    %v756 = vmax.f32 %v744, 0.0
    %v757 = vmax.f32 %v745, 0.0
    %v758 = vmax.f32 %v746, 0.0
    %v759 = vmax.f32 %v747, 0.0
    %v760 = vmax.f32 %v748, 0.0
    %v761 = vmax.f32 %v749, 0.0
    %v762 = vmax.f32 %v750, 0.0
    %v763 = vmax.f32 %v751, 0.0
    %v764 = vmax.f32 %v752, 0.0
    %v765 = vmax.f32 %v753, 0.0
    %v766 = vadd.f32 %v186, %v754
    %v767 = vadd.f32 %v191, %v755
    %v768 = vadd.f32 %v196, %v756
    %v769 = vadd.f32 %v201, %v757
    %v770 = vadd.f32 %v206, %v758
    %v771 = vadd.f32 %v211, %v759
    %v772 = vadd.f32 %v216, %v760
    %v773 = vadd.f32 %v221, %v761
    %v774 = vadd.f32 %v226, %v762
    %v775 = vadd.f32 %v231, %v763
    %v776 = vadd.f32 %v236, %v764
    %v777 = vadd.f32 %v241, %v765
    %v778 = vld [vmem:[#allocation5 + $0x90] sm:$0xff]
    %v779 = vld [vmem:[#allocation5 + $0x98] sm:$0xff]
    %v780 = vld [vmem:[#allocation5 + $0xa0] sm:$0xff]
    %v781 = vld [vmem:[#allocation5 + $0xa8] sm:$0xff]
    %v782 = vld [vmem:[#allocation5 + $0xd0] sm:$0xff]
    %v783 = vld [vmem:[#allocation5 + $0xd8] sm:$0xff]
    %v784 = vld [vmem:[#allocation5 + $0xe0] sm:$0xff]
    %v785 = vld [vmem:[#allocation5 + $0xe8] sm:$0xff]
    %v786 = vld [vmem:[#allocation5 + $0xf8] sm:$0x1]
    %787 = vmatprep.subr.mxu0 0.0
    %788 = vmatpush1.msra.mxu0 %v766
    %789 = vmatprep.subr.mxu0 0.0
    %790 = vmatpush1.msra.mxu0 %v767
    %791 = vmatprep.subr.mxu0 0.0
    %792 = vmatpush1.msra.mxu0 %v768
    %793 = vmatprep.subr.mxu0 0.0
    %794 = vmatpush1.msra.mxu0 %v769
    %795 = vmatprep.subr.mxu0 0.0
    %796 = vmatpush1.msra.mxu0 %v770
    %797 = vmatprep.subr.mxu0 0.0
    %798 = vmatpush1.msra.mxu0 %v771
    %799 = vmatprep.subr.mxu0 0.0
    %800 = vmatpush1.msra.mxu0 %v772
    %801 = vmatprep.subr.mxu0 0.0
    %802 = vmatpush1.msra.mxu0 %v773
    %803 = vmatprep.subr.mxu0 0.0
    %804 = vmatpush1.msra.mxu0 %v774
    %805 = vmatprep.subr.mxu0 0.0
    %806 = vmatpush1.msra.mxu0 %v775
    %807 = vmatprep.subr.mxu0 0.0
    %808 = vmatpush1.msra.mxu0 %v776
    %809 = vmatprep.subr.mxu0 0.0
    %810 = vmatpush1.msra.mxu0 %v777
    %811 = vmatprep.subr.mxu0 0.0
    %812 = vmatpush1.msra.mxu0 0.0
    %813 = vmatprep.subr.mxu0 0.0
    %814 = vmatpush1.msra.mxu0 0.0
    %815 = vmatprep.subr.mxu0 0.0
    %816 = vmatpush1.msra.mxu0 0.0
    %817 = vmatprep.subr.mxu0 0.0
    %818 = vmatpush1.msra.mxu0 0.0
    %819 = vmatprep.subr.mxu0 0.0
    %820 = vmatpush1.msra.mxu0 0.0
    %821 = vmatprep.subr.mxu0 0.0
    %822 = vmatpush1.msra.mxu0 0.0
    %823 = vmatprep.subr.mxu0 0.0
    %824 = vmatpush1.msra.mxu0 0.0
    %825 = vmatprep.subr.mxu0 0.0
    %826 = vmatpush1.msra.mxu0 0.0
    %827 = vmatprep.subr.mxu0 0.0
    %828 = vmatpush1.msra.mxu0 0.0
    %829 = vmatprep.subr.mxu0 0.0
    %830 = vmatpush1.msra.mxu0 0.0
    %831 = vmatprep.subr.mxu0 0.0
    %832 = vmatpush1.msra.mxu0 0.0
    %833 = vmatprep.subr.mxu0 0.0
    %834 = vmatpush1.msra.mxu0 0.0
    %835 = vmatprep.subr.mxu0 0.0
    %836 = vmatpush1.msra.mxu0 0.0
    %837 = vmatprep.subr.mxu0 0.0
    %838 = vmatpush1.msra.mxu0 0.0
    %839 = vmatprep.subr.mxu0 0.0
    %840 = vmatpush1.msra.mxu0 0.0
    %841 = vmatprep.subr.mxu0 0.0
    %842 = vmatpush1.msra.mxu0 0.0
    %843 = vmatprep.subr.mxu0 0.0
    %844 = vmatpush1.msra.mxu0 0.0
    %845 = vmatprep.subr.mxu0 0.0
    %846 = vmatpush1.msra.mxu0 0.0
    %847 = vmatprep.subr.mxu0 0.0
    %848 = vmatpush1.msra.mxu0 0.0
    %849 = vmatprep.subr.mxu0 0.0
    %850 = vmatpush1.msra.mxu0 0.0
    %851 = vmatprep.mubr.f32.mxu0 0.0
    %852 = vmatmul.mubr.f32.gmra.mrb[0].mxu0 %v255
    %v853 = vpop.f32.mrb[0].mxu0
    %v854 = vadd.f32 0.0, %v853
    %v855 = vpop.f32.mrb[0].mxu0
    %856 = vmatprep.mubr.f32.mxu0 0.0
    %857 = vmatmul.mubr.f32.gmra.mrb[0].mxu0 %v258
    %v858 = vpop.f32.mrb[0].mxu0
    %v859 = vadd.f32 0.0, %v858
    %v860 = vpop.f32.mrb[0].mxu0
    %861 = vmatprep.mubr.f32.mxu0 0.0
    %862 = vmatmul.mubr.f32.gmra.mrb[0].mxu0 %v261
    %v863 = vpop.f32.mrb[0].mxu0
    %v864 = vadd.f32 0.0, %v863
    %v865 = vpop.f32.mrb[0].mxu0
    %866 = vmatprep.mubr.f32.mxu0 0.0
    %867 = vmatmul.mubr.f32.gmra.mrb[0].mxu0 %v264
    %v868 = vpop.f32.mrb[0].mxu0
    %v869 = vadd.f32 0.0, %v868
    %v870 = vpop.f32.mrb[0].mxu0
    %871 = vmatprep.mubr.f32.mxu0 0.0
    %872 = vmatmul.mubr.f32.gmra.mrb[0].mxu0 %v267
    %v873 = vpop.f32.mrb[0].mxu0
    %v874 = vadd.f32 0.0, %v873
    %v875 = vpop.f32.mrb[0].mxu0
    %876 = vmatprep.mubr.f32.mxu0 0.0
    %877 = vmatmul.mubr.f32.gmra.mrb[0].mxu0 %v270
    %v878 = vpop.f32.mrb[0].mxu0
    %v879 = vadd.f32 0.0, %v878
    %v880 = vpop.f32.mrb[0].mxu0
    %881 = vmatprep.mubr.f32.mxu0 0.0
    %882 = vmatmul.mubr.f32.gmra.mrb[0].mxu0 %v273
    %v883 = vpop.f32.mrb[0].mxu0
    %v884 = vadd.f32 0.0, %v883
    %v885 = vpop.f32.mrb[0].mxu0
    %886 = vmatprep.mubr.f32.mxu0 0.0
    %887 = vmatmul.mubr.f32.gmra.mrb[0].mxu0 %v276
    %v888 = vpop.f32.mrb[0].mxu0
    %v889 = vadd.f32 0.0, %v888
    %v890 = vpop.f32.mrb[0].mxu0
    %891 = vmatprep.mubr.f32.mxu0 0.0
    %892 = vmatmul.mubr.f32.gmra.mrb[0].mxu0 %v279
    %v893 = vpop.f32.mrb[0].mxu0
    %v894 = vadd.f32 0.0, %v893
    %v895 = vpop.f32.mrb[0].mxu0
    %896 = vmatprep.mubr.f32.mxu0 0.0
    %897 = vmatmul.mubr.f32.gmra.mrb[0].mxu0 %v282
    %v898 = vpop.f32.mrb[0].mxu0
    %v899 = vadd.f32 0.0, %v898
    %v900 = vpop.f32.mrb[0].mxu0
    %901 = vmatprep.mubr.f32.mxu0 0.0
    %902 = vmatmul.mubr.f32.gmra.mrb[0].mxu0 %v285
    %v903 = vpop.f32.mrb[0].mxu0
    %v904 = vadd.f32 0.0, %v903
    %v905 = vpop.f32.mrb[0].mxu0
    %906 = vmatprep.mubr.f32.mxu0 0.0
    %907 = vmatmul.mubr.f32.gmra.mrb[0].mxu0 %v288
    %v908 = vpop.f32.mrb[0].mxu0
    %v909 = vadd.f32 0.0, %v908
    %v910 = vpop.f32.mrb[0].mxu0
    %911 = vdwg.mxu0
    %v913 = vsel %vm415, %v854, 0
    %v916 = vsel %vm415, %v859, 0
    %v919 = vsel %vm415, %v864, 0
    %v922 = vsel %vm415, %v869, 0
    %v925 = vsel %vm415, %v874, 0
    %v928 = vsel %vm415, %v879, 0
    %v931 = vsel %vm415, %v884, 0
    %v934 = vsel %vm415, %v889, 0
    %v937 = vsel %vm415, %v894, 0
    %v940 = vsel %vm415, %v899, 0
    %v943 = vsel %vm415, %v904, 0
    %v946 = vsel %vm415, %v909, 0
    %948 = vmatprep.subr.mxu0 0.0
    %949 = vmatpush1.msra.mxu0 %v782
    %950 = vmatprep.subr.mxu0 0.0
    %951 = vmatpush1.msra.mxu0 %v783
    %952 = vmatprep.subr.mxu0 0.0
    %953 = vmatpush1.msra.mxu0 %v784
    %954 = vmatprep.subr.mxu0 0.0
    %955 = vmatpush1.msra.mxu0 %v785
    %956 = vmatprep.subr.mxu0 0.0
    %957 = vmatpush1.msra.mxu0 0.0
    %958 = vmatprep.subr.mxu0 0.0
    %959 = vmatpush1.msra.mxu0 0.0
    %960 = vmatprep.subr.mxu0 0.0
    %961 = vmatpush1.msra.mxu0 0.0
    %962 = vmatprep.subr.mxu0 0.0
    %963 = vmatpush1.msra.mxu0 0.0
    %964 = vmatprep.subr.mxu0 0.0
    %965 = vmatpush1.msra.mxu0 0.0
    %966 = vmatprep.subr.mxu0 0.0
    %967 = vmatpush1.msra.mxu0 0.0
    %968 = vmatprep.subr.mxu0 0.0
    %969 = vmatpush1.msra.mxu0 0.0
    %970 = vmatprep.subr.mxu0 0.0
    %971 = vmatpush1.msra.mxu0 0.0
    %972 = vmatprep.subr.mxu0 0.0
    %973 = vmatpush1.msra.mxu0 0.0
    %974 = vmatprep.subr.mxu0 0.0
    %975 = vmatpush1.msra.mxu0 0.0
    %976 = vmatprep.subr.mxu0 0.0
    %977 = vmatpush1.msra.mxu0 0.0
    %978 = vmatprep.subr.mxu0 0.0
    %979 = vmatpush1.msra.mxu0 0.0
    %980 = vmatprep.subr.mxu0 0.0
    %981 = vmatpush1.msra.mxu0 0.0
    %982 = vmatprep.subr.mxu0 0.0
    %983 = vmatpush1.msra.mxu0 0.0
    %984 = vmatprep.subr.mxu0 0.0
    %985 = vmatpush1.msra.mxu0 0.0
    %986 = vmatprep.subr.mxu0 0.0
    %987 = vmatpush1.msra.mxu0 0.0
    %988 = vmatprep.subr.mxu0 0.0
    %989 = vmatpush1.msra.mxu0 0.0
    %990 = vmatprep.subr.mxu0 0.0
    %991 = vmatpush1.msra.mxu0 0.0
    %992 = vmatprep.subr.mxu0 0.0
    %993 = vmatpush1.msra.mxu0 0.0
    %994 = vmatprep.subr.mxu0 0.0
    %995 = vmatpush1.msra.mxu0 0.0
    %996 = vmatprep.subr.mxu0 0.0
    %997 = vmatpush1.msra.mxu0 0.0
    %998 = vmatprep.subr.mxu0 0.0
    %999 = vmatpush1.msra.mxu0 0.0
    %1000 = vmatprep.subr.mxu0 0.0
    %1001 = vmatpush1.msra.mxu0 0.0
    %1002 = vmatprep.subr.mxu0 0.0
    %1003 = vmatpush1.msra.mxu0 0.0
    %1004 = vmatprep.subr.mxu0 0.0
    %1005 = vmatpush1.msra.mxu0 0.0
    %1006 = vmatprep.subr.mxu0 0.0
    %1007 = vmatpush1.msra.mxu0 0.0
    %1008 = vmatprep.subr.mxu0 0.0
    %1009 = vmatpush1.msra.mxu0 0.0
    %1010 = vmatprep.subr.mxu0 0.0
    %1011 = vmatpush1.msra.mxu0 0.0
    %1012 = vmatprep.mubr.f32.mxu0 0.0
    %1013 = vmatmul.mubr.f32.gmra.mrb[0].mxu0 %v913
    %v1014 = vpop.f32.mrb[0].mxu0
    %v1015 = vadd.f32 0.0, %v1014
    %v1016 = vpop.f32.mrb[0].mxu0
    %1017 = vmatprep.mubr.f32.mxu0 0.0
    %1018 = vmatmul.mubr.f32.gmra.mrb[0].mxu0 %v916
    %v1019 = vpop.f32.mrb[0].mxu0
    %v1020 = vadd.f32 0.0, %v1019
    %v1021 = vpop.f32.mrb[0].mxu0
    %1022 = vmatprep.mubr.f32.mxu0 0.0
    %1023 = vmatmul.mubr.f32.gmra.mrb[0].mxu0 %v919
    %v1024 = vpop.f32.mrb[0].mxu0
    %v1025 = vadd.f32 0.0, %v1024
    %v1026 = vpop.f32.mrb[0].mxu0
    %1027 = vmatprep.mubr.f32.mxu0 0.0
    %1028 = vmatmul.mubr.f32.gmra.mrb[0].mxu0 %v922
    %v1029 = vpop.f32.mrb[0].mxu0
    %v1030 = vadd.f32 0.0, %v1029
    %v1031 = vpop.f32.mrb[0].mxu0
    %1032 = vmatprep.mubr.f32.mxu0 0.0
    %1033 = vmatmul.mubr.f32.gmra.mrb[0].mxu0 %v925
    %v1034 = vpop.f32.mrb[0].mxu0
    %v1035 = vadd.f32 0.0, %v1034
    %v1036 = vpop.f32.mrb[0].mxu0
    %1037 = vmatprep.mubr.f32.mxu0 0.0
    %1038 = vmatmul.mubr.f32.gmra.mrb[0].mxu0 %v928
    %v1039 = vpop.f32.mrb[0].mxu0
    %v1040 = vadd.f32 0.0, %v1039
    %v1041 = vpop.f32.mrb[0].mxu0
    %1042 = vmatprep.mubr.f32.mxu0 0.0
    %1043 = vmatmul.mubr.f32.gmra.mrb[0].mxu0 %v931
    %v1044 = vpop.f32.mrb[0].mxu0
    %v1045 = vadd.f32 0.0, %v1044
    %v1046 = vpop.f32.mrb[0].mxu0
    %1047 = vmatprep.mubr.f32.mxu0 0.0
    %1048 = vmatmul.mubr.f32.gmra.mrb[0].mxu0 %v934
    %v1049 = vpop.f32.mrb[0].mxu0
    %v1050 = vadd.f32 0.0, %v1049
    %v1051 = vpop.f32.mrb[0].mxu0
    %1052 = vmatprep.mubr.f32.mxu0 0.0
    %1053 = vmatmul.mubr.f32.gmra.mrb[0].mxu0 %v937
    %v1054 = vpop.f32.mrb[0].mxu0
    %v1055 = vadd.f32 0.0, %v1054
    %v1056 = vpop.f32.mrb[0].mxu0
    %1057 = vmatprep.mubr.f32.mxu0 0.0
    %1058 = vmatmul.mubr.f32.gmra.mrb[0].mxu0 %v940
    %v1059 = vpop.f32.mrb[0].mxu0
    %v1060 = vadd.f32 0.0, %v1059
    %v1061 = vpop.f32.mrb[0].mxu0
    %1062 = vmatprep.mubr.f32.mxu0 0.0
    %1063 = vmatmul.mubr.f32.gmra.mrb[0].mxu0 %v943
    %v1064 = vpop.f32.mrb[0].mxu0
    %v1065 = vadd.f32 0.0, %v1064
    %v1066 = vpop.f32.mrb[0].mxu0
    %1067 = vmatprep.mubr.f32.mxu0 0.0
    %1068 = vmatmul.mubr.f32.gmra.mrb[0].mxu0 %v946
    %v1069 = vpop.f32.mrb[0].mxu0
    %v1070 = vadd.f32 0.0, %v1069
    %v1071 = vpop.f32.mrb[0].mxu0
    %1072 = vdwg.mxu0
    %v1074 = vsel %vm415, %v766, 0
    %v1077 = vsel %vm415, %v767, 0
    %v1080 = vsel %vm415, %v768, 0
    %v1083 = vsel %vm415, %v769, 0
    %v1086 = vsel %vm415, %v770, 0
    %v1089 = vsel %vm415, %v771, 0
    %v1092 = vsel %vm415, %v772, 0
    %v1095 = vsel %vm415, %v773, 0
    %v1098 = vsel %vm415, %v774, 0
    %v1101 = vsel %vm415, %v775, 0
    %v1104 = vsel %vm415, %v776, 0
    %v1107 = vsel %vm415, %v777, 0
    %1109 = vmatprep.subr.mxu0 0.0
    %1110 = vmatpush1.msra.mxu0 %v778
    %1111 = vmatprep.subr.mxu0 0.0
    %1112 = vmatpush1.msra.mxu0 %v779
    %1113 = vmatprep.subr.mxu0 0.0
    %1114 = vmatpush1.msra.mxu0 %v780
    %1115 = vmatprep.subr.mxu0 0.0
    %1116 = vmatpush1.msra.mxu0 %v781
    %1117 = vmatprep.subr.mxu0 0.0
    %1118 = vmatpush1.msra.mxu0 0.0
    %1119 = vmatprep.subr.mxu0 0.0
    %1120 = vmatpush1.msra.mxu0 0.0
    %1121 = vmatprep.subr.mxu0 0.0
    %1122 = vmatpush1.msra.mxu0 0.0
    %1123 = vmatprep.subr.mxu0 0.0
    %1124 = vmatpush1.msra.mxu0 0.0
    %1125 = vmatprep.subr.mxu0 0.0
    %1126 = vmatpush1.msra.mxu0 0.0
    %1127 = vmatprep.subr.mxu0 0.0
    %1128 = vmatpush1.msra.mxu0 0.0
    %1129 = vmatprep.subr.mxu0 0.0
    %1130 = vmatpush1.msra.mxu0 0.0
    %1131 = vmatprep.subr.mxu0 0.0
    %1132 = vmatpush1.msra.mxu0 0.0
    %1133 = vmatprep.subr.mxu0 0.0
    %1134 = vmatpush1.msra.mxu0 0.0
    %1135 = vmatprep.subr.mxu0 0.0
    %1136 = vmatpush1.msra.mxu0 0.0
    %1137 = vmatprep.subr.mxu0 0.0
    %1138 = vmatpush1.msra.mxu0 0.0
    %1139 = vmatprep.subr.mxu0 0.0
    %1140 = vmatpush1.msra.mxu0 0.0
    %1141 = vmatprep.subr.mxu0 0.0
    %1142 = vmatpush1.msra.mxu0 0.0
    %1143 = vmatprep.subr.mxu0 0.0
    %1144 = vmatpush1.msra.mxu0 0.0
    %1145 = vmatprep.subr.mxu0 0.0
    %1146 = vmatpush1.msra.mxu0 0.0
    %1147 = vmatprep.subr.mxu0 0.0
    %1148 = vmatpush1.msra.mxu0 0.0
    %1149 = vmatprep.subr.mxu0 0.0
    %1150 = vmatpush1.msra.mxu0 0.0
    %1151 = vmatprep.subr.mxu0 0.0
    %1152 = vmatpush1.msra.mxu0 0.0
    %1153 = vmatprep.subr.mxu0 0.0
    %1154 = vmatpush1.msra.mxu0 0.0
    %1155 = vmatprep.subr.mxu0 0.0
    %1156 = vmatpush1.msra.mxu0 0.0
    %1157 = vmatprep.subr.mxu0 0.0
    %1158 = vmatpush1.msra.mxu0 0.0
    %1159 = vmatprep.subr.mxu0 0.0
    %1160 = vmatpush1.msra.mxu0 0.0
    %1161 = vmatprep.subr.mxu0 0.0
    %1162 = vmatpush1.msra.mxu0 0.0
    %1163 = vmatprep.subr.mxu0 0.0
    %1164 = vmatpush1.msra.mxu0 0.0
    %1165 = vmatprep.subr.mxu0 0.0
    %1166 = vmatpush1.msra.mxu0 0.0
    %1167 = vmatprep.subr.mxu0 0.0
    %1168 = vmatpush1.msra.mxu0 0.0
    %1169 = vmatprep.subr.mxu0 0.0
    %1170 = vmatpush1.msra.mxu0 0.0
    %1171 = vmatprep.subr.mxu0 0.0
    %1172 = vmatpush1.msra.mxu0 0.0
    %1173 = vmatprep.mubr.f32.mxu0 0.0
    %1174 = vmatmul.mubr.f32.gmra.mrb[0].mxu0 %v1074
    %v1175 = vpop.f32.mrb[0].mxu0
    %v1176 = vadd.f32 %v1015, %v1175
    %v1177 = vpop.f32.mrb[0].mxu0
    %1178 = vmatprep.mubr.f32.mxu0 0.0
    %1179 = vmatmul.mubr.f32.gmra.mrb[0].mxu0 %v1077
    %v1180 = vpop.f32.mrb[0].mxu0
    %v1181 = vadd.f32 %v1020, %v1180
    %v1182 = vpop.f32.mrb[0].mxu0
    %1183 = vmatprep.mubr.f32.mxu0 0.0
    %1184 = vmatmul.mubr.f32.gmra.mrb[0].mxu0 %v1080
    %v1185 = vpop.f32.mrb[0].mxu0
    %v1186 = vadd.f32 %v1025, %v1185
    %v1187 = vpop.f32.mrb[0].mxu0
    %1188 = vmatprep.mubr.f32.mxu0 0.0
    %1189 = vmatmul.mubr.f32.gmra.mrb[0].mxu0 %v1083
    %v1190 = vpop.f32.mrb[0].mxu0
    %v1191 = vadd.f32 %v1030, %v1190
    %v1192 = vpop.f32.mrb[0].mxu0
    %1193 = vmatprep.mubr.f32.mxu0 0.0
    %1194 = vmatmul.mubr.f32.gmra.mrb[0].mxu0 %v1086
    %v1195 = vpop.f32.mrb[0].mxu0
    %v1196 = vadd.f32 %v1035, %v1195
    %v1197 = vpop.f32.mrb[0].mxu0
    %1198 = vmatprep.mubr.f32.mxu0 0.0
    %1199 = vmatmul.mubr.f32.gmra.mrb[0].mxu0 %v1089
    %v1200 = vpop.f32.mrb[0].mxu0
    %v1201 = vadd.f32 %v1040, %v1200
    %v1202 = vpop.f32.mrb[0].mxu0
    %1203 = vmatprep.mubr.f32.mxu0 0.0
    %1204 = vmatmul.mubr.f32.gmra.mrb[0].mxu0 %v1092
    %v1205 = vpop.f32.mrb[0].mxu0
    %v1206 = vadd.f32 %v1045, %v1205
    %v1207 = vpop.f32.mrb[0].mxu0
    %1208 = vmatprep.mubr.f32.mxu0 0.0
    %1209 = vmatmul.mubr.f32.gmra.mrb[0].mxu0 %v1095
    %v1210 = vpop.f32.mrb[0].mxu0
    %v1211 = vadd.f32 %v1050, %v1210
    %v1212 = vpop.f32.mrb[0].mxu0
    %1213 = vmatprep.mubr.f32.mxu0 0.0
    %1214 = vmatmul.mubr.f32.gmra.mrb[0].mxu0 %v1098
    %v1215 = vpop.f32.mrb[0].mxu0
    %v1216 = vadd.f32 %v1055, %v1215
    %v1217 = vpop.f32.mrb[0].mxu0
    %1218 = vmatprep.mubr.f32.mxu0 0.0
    %1219 = vmatmul.mubr.f32.gmra.mrb[0].mxu0 %v1101
    %v1220 = vpop.f32.mrb[0].mxu0
    %v1221 = vadd.f32 %v1060, %v1220
    %v1222 = vpop.f32.mrb[0].mxu0
    %1223 = vmatprep.mubr.f32.mxu0 0.0
    %1224 = vmatmul.mubr.f32.gmra.mrb[0].mxu0 %v1104
    %v1225 = vpop.f32.mrb[0].mxu0
    %v1226 = vadd.f32 %v1065, %v1225
    %v1227 = vpop.f32.mrb[0].mxu0
    %1228 = vmatprep.mubr.f32.mxu0 0.0
    %1229 = vmatmul.mubr.f32.gmra.mrb[0].mxu0 %v1107
    %v1230 = vpop.f32.mrb[0].mxu0
    %v1231 = vadd.f32 %v1070, %v1230
    %v1232 = vpop.f32.mrb[0].mxu0
    %1233 = vdwg.mxu0
    %v1234 = vlaneseq
    %v1235 = vshrl.u32 %v1234, 7
    %v1236 = vsub.s32 0, %v1235
    %v1237 = vrot.slane %v786, %v1236
    %v1238 = vadd.f32 %v1176, %v1237
    %v1239 = vadd.f32 %v1181, %v1237
    %v1240 = vadd.f32 %v1186, %v1237
    %v1241 = vadd.f32 %v1191, %v1237
    %v1242 = vadd.f32 %v1196, %v1237
    %v1243 = vadd.f32 %v1201, %v1237
    %v1244 = vadd.f32 %v1206, %v1237
    %v1245 = vadd.f32 %v1211, %v1237
    %v1246 = vadd.f32 %v1216, %v1237
    %v1247 = vadd.f32 %v1221, %v1237
    %v1248 = vadd.f32 %v1226, %v1237
    %v1249 = vadd.f32 %v1231, %v1237
    %v1250 = vmax.f32 %v1238, 0.0
    %v1251 = vmax.f32 %v1239, 0.0
    %v1252 = vmax.f32 %v1240, 0.0
    %v1253 = vmax.f32 %v1241, 0.0
    %v1254 = vmax.f32 %v1242, 0.0
    %v1255 = vmax.f32 %v1243, 0.0
    %v1256 = vmax.f32 %v1244, 0.0
    %v1257 = vmax.f32 %v1245, 0.0
    %v1258 = vmax.f32 %v1246, 0.0
    %v1259 = vmax.f32 %v1247, 0.0
    %v1260 = vmax.f32 %v1248, 0.0
    %v1261 = vmax.f32 %v1249, 0.0
    %v1262 = vadd.f32 %v766, %v1250
    %v1263 = vadd.f32 %v767, %v1251
    %v1264 = vadd.f32 %v768, %v1252
    %v1265 = vadd.f32 %v769, %v1253
    %v1266 = vadd.f32 %v770, %v1254
    %v1267 = vadd.f32 %v771, %v1255
    %v1268 = vadd.f32 %v772, %v1256
    %v1269 = vadd.f32 %v773, %v1257
    %v1270 = vadd.f32 %v774, %v1258
    %v1271 = vadd.f32 %v775, %v1259
    %v1272 = vadd.f32 %v776, %v1260
    %v1273 = vadd.f32 %v777, %v1261
    %v1274 = vld [vmem:[#allocation5 + $0x100] sm:$0xff]
    %v1275 = vld [vmem:[#allocation5 + $0x108] sm:$0xff]
    %v1276 = vld [vmem:[#allocation5 + $0x110] sm:$0xff]
    %v1277 = vld [vmem:[#allocation5 + $0x118] sm:$0xff]
    %v1278 = vld [vmem:[#allocation5 + $0x120] sm:$0xff]
    %v1279 = vld [vmem:[#allocation5 + $0x128] sm:$0xff]
    %v1280 = vld [vmem:[#allocation5 + $0x130] sm:$0xff]
    %v1281 = vld [vmem:[#allocation5 + $0x138] sm:$0xff]
    %v1282 = vld [vmem:[#allocation5 + $0x140] sm:$0x1]
    %v1283 = vlaneseq
    %v1284 = vshrl.u32 %v1283, 7
    %v1285 = vsub.s32 0, %v1284
    %v1286 = vrot.slane %v1282, %v1285
    %v1288 = vsel %vm415, %v1262, 0
    %v1291 = vsel %vm415, %v1263, 0
    %v1294 = vsel %vm415, %v1264, 0
    %v1297 = vsel %vm415, %v1265, 0
    %v1300 = vsel %vm415, %v1266, 0
    %v1303 = vsel %vm415, %v1267, 0
    %v1306 = vsel %vm415, %v1268, 0
    %v1309 = vsel %vm415, %v1269, 0
    %v1312 = vsel %vm415, %v1270, 0
    %v1315 = vsel %vm415, %v1271, 0
    %v1318 = vsel %vm415, %v1272, 0
    %v1321 = vsel %vm415, %v1273, 0
    %1323 = vmatprep.subr.mxu0 0.0
    %1324 = vmatpush1.msra.mxu0 %v1274
    %1325 = vmatprep.subr.mxu0 0.0
    %1326 = vmatpush1.msra.mxu0 %v1275
    %1327 = vmatprep.subr.mxu0 0.0
    %1328 = vmatpush1.msra.mxu0 %v1276
    %1329 = vmatprep.subr.mxu0 0.0
    %1330 = vmatpush1.msra.mxu0 %v1277
    %1331 = vmatprep.subr.mxu0 0.0
    %1332 = vmatpush1.msra.mxu0 0.0
    %1333 = vmatprep.subr.mxu0 0.0
    %1334 = vmatpush1.msra.mxu0 0.0
    %1335 = vmatprep.subr.mxu0 0.0
    %1336 = vmatpush1.msra.mxu0 0.0
    %1337 = vmatprep.subr.mxu0 0.0
    %1338 = vmatpush1.msra.mxu0 0.0
    %1339 = vmatprep.subr.mxu0 0.0
    %1340 = vmatpush1.msra.mxu0 0.0
    %1341 = vmatprep.subr.mxu0 0.0
    %1342 = vmatpush1.msra.mxu0 0.0
    %1343 = vmatprep.subr.mxu0 0.0
    %1344 = vmatpush1.msra.mxu0 0.0
    %1345 = vmatprep.subr.mxu0 0.0
    %1346 = vmatpush1.msra.mxu0 0.0
    %1347 = vmatprep.subr.mxu0 0.0
    %1348 = vmatpush1.msra.mxu0 0.0
    %1349 = vmatprep.subr.mxu0 0.0
    %1350 = vmatpush1.msra.mxu0 0.0
    %1351 = vmatprep.subr.mxu0 0.0
    %1352 = vmatpush1.msra.mxu0 0.0
    %1353 = vmatprep.subr.mxu0 0.0
    %1354 = vmatpush1.msra.mxu0 0.0
    %1355 = vmatprep.subr.mxu0 0.0
    %1356 = vmatpush1.msra.mxu0 0.0
    %1357 = vmatprep.subr.mxu0 0.0
    %1358 = vmatpush1.msra.mxu0 0.0
    %1359 = vmatprep.subr.mxu0 0.0
    %1360 = vmatpush1.msra.mxu0 0.0
    %1361 = vmatprep.subr.mxu0 0.0
    %1362 = vmatpush1.msra.mxu0 0.0
    %1363 = vmatprep.subr.mxu0 0.0
    %1364 = vmatpush1.msra.mxu0 0.0
    %1365 = vmatprep.subr.mxu0 0.0
    %1366 = vmatpush1.msra.mxu0 0.0
    %1367 = vmatprep.subr.mxu0 0.0
    %1368 = vmatpush1.msra.mxu0 0.0
    %1369 = vmatprep.subr.mxu0 0.0
    %1370 = vmatpush1.msra.mxu0 0.0
    %1371 = vmatprep.subr.mxu0 0.0
    %1372 = vmatpush1.msra.mxu0 0.0
    %1373 = vmatprep.subr.mxu0 0.0
    %1374 = vmatpush1.msra.mxu0 0.0
    %1375 = vmatprep.subr.mxu0 0.0
    %1376 = vmatpush1.msra.mxu0 0.0
    %1377 = vmatprep.subr.mxu0 0.0
    %1378 = vmatpush1.msra.mxu0 0.0
    %1379 = vmatprep.subr.mxu0 0.0
    %1380 = vmatpush1.msra.mxu0 0.0
    %1381 = vmatprep.subr.mxu0 0.0
    %1382 = vmatpush1.msra.mxu0 0.0
    %1383 = vmatprep.subr.mxu0 0.0
    %1384 = vmatpush1.msra.mxu0 0.0
    %1385 = vmatprep.subr.mxu0 0.0
    %1386 = vmatpush1.msra.mxu0 0.0
    %1387 = vmatprep.mubr.f32.mxu0 0.0
    %1388 = vmatmul.mubr.f32.gmra.mrb[0].mxu0 %v1288
    %v1389 = vpop.f32.mrb[0].mxu0
    %v1390 = vadd.f32 %v1286, %v1389
    %v1391 = vpop.f32.mrb[0].mxu0
    %1392 = vmatprep.mubr.f32.mxu0 0.0
    %1393 = vmatmul.mubr.f32.gmra.mrb[0].mxu0 %v1291
    %v1394 = vpop.f32.mrb[0].mxu0
    %v1395 = vadd.f32 %v1286, %v1394
    %v1396 = vpop.f32.mrb[0].mxu0
    %1397 = vmatprep.mubr.f32.mxu0 0.0
    %1398 = vmatmul.mubr.f32.gmra.mrb[0].mxu0 %v1294
    %v1399 = vpop.f32.mrb[0].mxu0
    %v1400 = vadd.f32 %v1286, %v1399
    %v1401 = vpop.f32.mrb[0].mxu0
    %1402 = vmatprep.mubr.f32.mxu0 0.0
    %1403 = vmatmul.mubr.f32.gmra.mrb[0].mxu0 %v1297
    %v1404 = vpop.f32.mrb[0].mxu0
    %v1405 = vadd.f32 %v1286, %v1404
    %v1406 = vpop.f32.mrb[0].mxu0
    %1407 = vmatprep.mubr.f32.mxu0 0.0
    %1408 = vmatmul.mubr.f32.gmra.mrb[0].mxu0 %v1300
    %v1409 = vpop.f32.mrb[0].mxu0
    %v1410 = vadd.f32 %v1286, %v1409
    %v1411 = vpop.f32.mrb[0].mxu0
    %1412 = vmatprep.mubr.f32.mxu0 0.0
    %1413 = vmatmul.mubr.f32.gmra.mrb[0].mxu0 %v1303
    %v1414 = vpop.f32.mrb[0].mxu0
    %v1415 = vadd.f32 %v1286, %v1414
    %v1416 = vpop.f32.mrb[0].mxu0
    %1417 = vmatprep.mubr.f32.mxu0 0.0
    %1418 = vmatmul.mubr.f32.gmra.mrb[0].mxu0 %v1306
    %v1419 = vpop.f32.mrb[0].mxu0
    %v1420 = vadd.f32 %v1286, %v1419
    %v1421 = vpop.f32.mrb[0].mxu0
    %1422 = vmatprep.mubr.f32.mxu0 0.0
    %1423 = vmatmul.mubr.f32.gmra.mrb[0].mxu0 %v1309
    %v1424 = vpop.f32.mrb[0].mxu0
    %v1425 = vadd.f32 %v1286, %v1424
    %v1426 = vpop.f32.mrb[0].mxu0
    %1427 = vmatprep.mubr.f32.mxu0 0.0
    %1428 = vmatmul.mubr.f32.gmra.mrb[0].mxu0 %v1312
    %v1429 = vpop.f32.mrb[0].mxu0
    %v1430 = vadd.f32 %v1286, %v1429
    %v1431 = vpop.f32.mrb[0].mxu0
    %1432 = vmatprep.mubr.f32.mxu0 0.0
    %1433 = vmatmul.mubr.f32.gmra.mrb[0].mxu0 %v1315
    %v1434 = vpop.f32.mrb[0].mxu0
    %v1435 = vadd.f32 %v1286, %v1434
    %v1436 = vpop.f32.mrb[0].mxu0
    %1437 = vmatprep.mubr.f32.mxu0 0.0
    %1438 = vmatmul.mubr.f32.gmra.mrb[0].mxu0 %v1318
    %v1439 = vpop.f32.mrb[0].mxu0
    %v1440 = vadd.f32 %v1286, %v1439
    %v1441 = vpop.f32.mrb[0].mxu0
    %1442 = vmatprep.mubr.f32.mxu0 0.0
    %1443 = vmatmul.mubr.f32.gmra.mrb[0].mxu0 %v1321
    %v1444 = vpop.f32.mrb[0].mxu0
    %v1445 = vadd.f32 %v1286, %v1444
    %v1446 = vpop.f32.mrb[0].mxu0
    %1447 = vdwg.mxu0
    %v1449 = vsel %vm415, 0.0, 0
    %1451 = vmatprep.subr.mxu0 0.0
    %1452 = vmatpush1.msra.mxu0 %v1278
    %1453 = vmatprep.subr.mxu0 0.0
    %1454 = vmatpush1.msra.mxu0 %v1279
    %1455 = vmatprep.subr.mxu0 0.0
    %1456 = vmatpush1.msra.mxu0 %v1280
    %1457 = vmatprep.subr.mxu0 0.0
    %1458 = vmatpush1.msra.mxu0 %v1281
    %1459 = vmatprep.subr.mxu0 0.0
    %1460 = vmatpush1.msra.mxu0 0.0
    %1461 = vmatprep.subr.mxu0 0.0
    %1462 = vmatpush1.msra.mxu0 0.0
    %1463 = vmatprep.subr.mxu0 0.0
    %1464 = vmatpush1.msra.mxu0 0.0
    %1465 = vmatprep.subr.mxu0 0.0
    %1466 = vmatpush1.msra.mxu0 0.0
    %1467 = vmatprep.subr.mxu0 0.0
    %1468 = vmatpush1.msra.mxu0 0.0
    %1469 = vmatprep.subr.mxu0 0.0
    %1470 = vmatpush1.msra.mxu0 0.0
    %1471 = vmatprep.subr.mxu0 0.0
    %1472 = vmatpush1.msra.mxu0 0.0
    %1473 = vmatprep.subr.mxu0 0.0
    %1474 = vmatpush1.msra.mxu0 0.0
    %1475 = vmatprep.subr.mxu0 0.0
    %1476 = vmatpush1.msra.mxu0 0.0
    %1477 = vmatprep.subr.mxu0 0.0
    %1478 = vmatpush1.msra.mxu0 0.0
    %1479 = vmatprep.subr.mxu0 0.0
    %1480 = vmatpush1.msra.mxu0 0.0
    %1481 = vmatprep.subr.mxu0 0.0
    %1482 = vmatpush1.msra.mxu0 0.0
    %1483 = vmatprep.subr.mxu0 0.0
    %1484 = vmatpush1.msra.mxu0 0.0
    %1485 = vmatprep.subr.mxu0 0.0
    %1486 = vmatpush1.msra.mxu0 0.0
    %1487 = vmatprep.subr.mxu0 0.0
    %1488 = vmatpush1.msra.mxu0 0.0
    %1489 = vmatprep.subr.mxu0 0.0
    %1490 = vmatpush1.msra.mxu0 0.0
    %1491 = vmatprep.subr.mxu0 0.0
    %1492 = vmatpush1.msra.mxu0 0.0
    %1493 = vmatprep.subr.mxu0 0.0
    %1494 = vmatpush1.msra.mxu0 0.0
    %1495 = vmatprep.subr.mxu0 0.0
    %1496 = vmatpush1.msra.mxu0 0.0
    %1497 = vmatprep.subr.mxu0 0.0
    %1498 = vmatpush1.msra.mxu0 0.0
    %1499 = vmatprep.subr.mxu0 0.0
    %1500 = vmatpush1.msra.mxu0 0.0
    %1501 = vmatprep.subr.mxu0 0.0
    %1502 = vmatpush1.msra.mxu0 0.0
    %1503 = vmatprep.subr.mxu0 0.0
    %1504 = vmatpush1.msra.mxu0 0.0
    %1505 = vmatprep.subr.mxu0 0.0
    %1506 = vmatpush1.msra.mxu0 0.0
    %1507 = vmatprep.subr.mxu0 0.0
    %1508 = vmatpush1.msra.mxu0 0.0
    %1509 = vmatprep.subr.mxu0 0.0
    %1510 = vmatpush1.msra.mxu0 0.0
    %1511 = vmatprep.subr.mxu0 0.0
    %1512 = vmatpush1.msra.mxu0 0.0
    %1513 = vmatprep.subr.mxu0 0.0
    %1514 = vmatpush1.msra.mxu0 0.0
    %1515 = vmatprep.mubr.f32.mxu0 0.0
    %1516 = vmatmul.mubr.f32.gmra.mrb[0].mxu0 %v1449
    %v1517 = vpop.f32.mrb[0].mxu0
    %v1518 = vadd.f32 0.0, %v1517
    %v1519 = vpop.f32.mrb[0].mxu0
    %1520 = vmatprep.mubr.f32.mxu0 0.0
    %1521 = vmatmul.mubr.f32.gmra.mrb[0].mxu0 %v1449
    %v1522 = vpop.f32.mrb[0].mxu0
    %v1523 = vadd.f32 0.0, %v1522
    %v1524 = vpop.f32.mrb[0].mxu0
    %1525 = vdwg.mxu0
    %v1526 = vadd.f32 %v1390, %v1518
    %v1527 = vadd.f32 %v1395, %v1523
    %v1528 = vxor.u32 %v1526, 2147483648
    %v1529 = vxor.u32 %v1527, 2147483648
    %v1530 = vmul.f32 %v1528, 1.442695
    %v1531 = vpow.pop %v1530
    %v1532 = vmul.f32 %v1529, 1.442695
    %v1533 = vpow.pop %v1532
    %v1534 = vadd.f32 %v1531, 1.0
    %v1535 = vadd.f32 %v1533, 1.0
    %v1536 = vrcp.pop %v1534
    %v1537 = vmul.f32 1.0, %v1536
    %v1538 = vrcp.pop %v1535
    %v1539 = vmul.f32 1.0, %v1538
    %v1540 = vtanh.pop %v1526
    %v1541 = vtanh.pop %v1527
    %v1542 = vmul.f32 %v1537, 0.0
    %v1543 = vmul.f32 %v1539, 0.0
    %1546 = vrot.lane.b32.xlu0 %v1540, 64
    %v1547 = vpop.permute.xlu0 %1546
    %1548 = vrot.lane.b32.xlu0 %v1541, 64
    %v1549 = vpop.permute.xlu0 %1548
    %v1552 = vmul.f32 %v1537, %v1547
    %v1553 = vmul.f32 %v1539, %v1549
    %1556 = vrot.lane.b32.xlu0 %v1552, 32
    %v1557 = vpop.permute.xlu0 %1556
    %1558 = vrot.lane.b32.xlu0 %v1553, 32
    %v1559 = vpop.permute.xlu0 %1558
    %v1562 = vadd.f32 %v1542, %v1557
    %v1563 = vadd.f32 %v1543, %v1559
    %v1564 = vtanh.pop %v1562
    %v1565 = vtanh.pop %v1563
    %1568 = vrot.lane.b32.xlu0 %v1564, 64
    %v1569 = vpop.permute.xlu0 %1568
    %1570 = vrot.lane.b32.xlu0 %v1565, 64
    %v1571 = vpop.permute.xlu0 %1570
    %v1574 = vmul.f32 %v1537, %v1569
    %v1575 = vmul.f32 %v1539, %v1571
    %1578 = vrot.lane.b32.xlu0 %v1574, 32
    %v1579 = vpop.permute.xlu0 %1578
    %1580 = vrot.lane.b32.xlu0 %v1575, 32
    %v1581 = vpop.permute.xlu0 %1580
    %v1582 = vsel %vm415, %v1579, 0
    %v1584 = vsel %vm415, %v1581, 0
    %1586 = vmatprep.subr.mxu0 0.0
    %1587 = vmatpush1.msra.mxu0 %v1278
    %1588 = vmatprep.subr.mxu0 0.0
    %1589 = vmatpush1.msra.mxu0 %v1279
    %1590 = vmatprep.subr.mxu0 0.0
    %1591 = vmatpush1.msra.mxu0 %v1280
    %1592 = vmatprep.subr.mxu0 0.0
    %1593 = vmatpush1.msra.mxu0 %v1281
    %1594 = vmatprep.subr.mxu0 0.0
    %1595 = vmatpush1.msra.mxu0 0.0
    %1596 = vmatprep.subr.mxu0 0.0
    %1597 = vmatpush1.msra.mxu0 0.0
    %1598 = vmatprep.subr.mxu0 0.0
    %1599 = vmatpush1.msra.mxu0 0.0
    %1600 = vmatprep.subr.mxu0 0.0
    %1601 = vmatpush1.msra.mxu0 0.0
    %1602 = vmatprep.subr.mxu0 0.0
    %1603 = vmatpush1.msra.mxu0 0.0
    %1604 = vmatprep.subr.mxu0 0.0
    %1605 = vmatpush1.msra.mxu0 0.0
    %1606 = vmatprep.subr.mxu0 0.0
    %1607 = vmatpush1.msra.mxu0 0.0
    %1608 = vmatprep.subr.mxu0 0.0
    %1609 = vmatpush1.msra.mxu0 0.0
    %1610 = vmatprep.subr.mxu0 0.0
    %1611 = vmatpush1.msra.mxu0 0.0
    %1612 = vmatprep.subr.mxu0 0.0
    %1613 = vmatpush1.msra.mxu0 0.0
    %1614 = vmatprep.subr.mxu0 0.0
    %1615 = vmatpush1.msra.mxu0 0.0
    %1616 = vmatprep.subr.mxu0 0.0
    %1617 = vmatpush1.msra.mxu0 0.0
    %1618 = vmatprep.subr.mxu0 0.0
    %1619 = vmatpush1.msra.mxu0 0.0
    %1620 = vmatprep.subr.mxu0 0.0
    %1621 = vmatpush1.msra.mxu0 0.0
    %1622 = vmatprep.subr.mxu0 0.0
    %1623 = vmatpush1.msra.mxu0 0.0
    %1624 = vmatprep.subr.mxu0 0.0
    %1625 = vmatpush1.msra.mxu0 0.0
    %1626 = vmatprep.subr.mxu0 0.0
    %1627 = vmatpush1.msra.mxu0 0.0
    %1628 = vmatprep.subr.mxu0 0.0
    %1629 = vmatpush1.msra.mxu0 0.0
    %1630 = vmatprep.subr.mxu0 0.0
    %1631 = vmatpush1.msra.mxu0 0.0
    %1632 = vmatprep.subr.mxu0 0.0
    %1633 = vmatpush1.msra.mxu0 0.0
    %1634 = vmatprep.subr.mxu0 0.0
    %1635 = vmatpush1.msra.mxu0 0.0
    %1636 = vmatprep.subr.mxu0 0.0
    %1637 = vmatpush1.msra.mxu0 0.0
    %1638 = vmatprep.subr.mxu0 0.0
    %1639 = vmatpush1.msra.mxu0 0.0
    %1640 = vmatprep.subr.mxu0 0.0
    %1641 = vmatpush1.msra.mxu0 0.0
    %1642 = vmatprep.subr.mxu0 0.0
    %1643 = vmatpush1.msra.mxu0 0.0
    %1644 = vmatprep.subr.mxu0 0.0
    %1645 = vmatpush1.msra.mxu0 0.0
    %1646 = vmatprep.subr.mxu0 0.0
    %1647 = vmatpush1.msra.mxu0 0.0
    %1648 = vmatprep.subr.mxu0 0.0
    %1649 = vmatpush1.msra.mxu0 0.0
    %1650 = vmatprep.mubr.f32.mxu0 0.0
    %1651 = vmatmul.mubr.f32.gmra.mrb[0].mxu0 %v1582
    %v1652 = vpop.f32.mrb[0].mxu0
    %v1653 = vadd.f32 0.0, %v1652
    %v1654 = vpop.f32.mrb[0].mxu0
    %1655 = vmatprep.mubr.f32.mxu0 0.0
    %1656 = vmatmul.mubr.f32.gmra.mrb[0].mxu0 %v1584
    %v1657 = vpop.f32.mrb[0].mxu0
    %v1658 = vadd.f32 0.0, %v1657
    %v1659 = vpop.f32.mrb[0].mxu0
    %1660 = vdwg.mxu0
    %v1661 = vadd.f32 %v1400, %v1653
    %v1662 = vadd.f32 %v1405, %v1658
    %v1663 = vxor.u32 %v1661, 2147483648
    %v1664 = vxor.u32 %v1662, 2147483648
    %v1665 = vmul.f32 %v1663, 1.442695
    %v1666 = vpow.pop %v1665
    %v1667 = vmul.f32 %v1664, 1.442695
    %v1668 = vpow.pop %v1667
    %v1669 = vadd.f32 %v1666, 1.0
    %v1670 = vadd.f32 %v1668, 1.0
    %v1671 = vrcp.pop %v1669
    %v1672 = vmul.f32 1.0, %v1671
    %v1673 = vrcp.pop %v1670
    %v1674 = vmul.f32 1.0, %v1673
    %v1675 = vtanh.pop %v1661
    %v1676 = vtanh.pop %v1662
    %v1677 = vmul.f32 %v1672, %v1562
    %v1678 = vmul.f32 %v1674, %v1563
    %1681 = vrot.lane.b32.xlu0 %v1675, 64
    %v1682 = vpop.permute.xlu0 %1681
    %1683 = vrot.lane.b32.xlu0 %v1676, 64
    %v1684 = vpop.permute.xlu0 %1683
    %v1687 = vmul.f32 %v1672, %v1682
    %v1688 = vmul.f32 %v1674, %v1684
    %1691 = vrot.lane.b32.xlu0 %v1687, 32
    %v1692 = vpop.permute.xlu0 %1691
    %1693 = vrot.lane.b32.xlu0 %v1688, 32
    %v1694 = vpop.permute.xlu0 %1693
    %v1697 = vadd.f32 %v1677, %v1692
    %v1698 = vadd.f32 %v1678, %v1694
    %v1699 = vtanh.pop %v1697
    %v1700 = vtanh.pop %v1698
    %1703 = vrot.lane.b32.xlu0 %v1699, 64
    %v1704 = vpop.permute.xlu0 %1703
    %1705 = vrot.lane.b32.xlu0 %v1700, 64
    %v1706 = vpop.permute.xlu0 %1705
    %v1709 = vmul.f32 %v1672, %v1704
    %v1710 = vmul.f32 %v1674, %v1706
    %1713 = vrot.lane.b32.xlu0 %v1709, 32
    %v1714 = vpop.permute.xlu0 %1713
    %1715 = vrot.lane.b32.xlu0 %v1710, 32
    %v1716 = vpop.permute.xlu0 %1715
    %v1717 = vsel %vm415, %v1714, 0
    %v1719 = vsel %vm415, %v1716, 0
    %1721 = vmatprep.subr.mxu0 0.0
    %1722 = vmatpush1.msra.mxu0 %v1278
    %1723 = vmatprep.subr.mxu0 0.0
    %1724 = vmatpush1.msra.mxu0 %v1279
    %1725 = vmatprep.subr.mxu0 0.0
    %1726 = vmatpush1.msra.mxu0 %v1280
    %1727 = vmatprep.subr.mxu0 0.0
    %1728 = vmatpush1.msra.mxu0 %v1281
    %1729 = vmatprep.subr.mxu0 0.0
    %1730 = vmatpush1.msra.mxu0 0.0
    %1731 = vmatprep.subr.mxu0 0.0
    %1732 = vmatpush1.msra.mxu0 0.0
    %1733 = vmatprep.subr.mxu0 0.0
    %1734 = vmatpush1.msra.mxu0 0.0
    %1735 = vmatprep.subr.mxu0 0.0
    %1736 = vmatpush1.msra.mxu0 0.0
    %1737 = vmatprep.subr.mxu0 0.0
    %1738 = vmatpush1.msra.mxu0 0.0
    %1739 = vmatprep.subr.mxu0 0.0
    %1740 = vmatpush1.msra.mxu0 0.0
    %1741 = vmatprep.subr.mxu0 0.0
    %1742 = vmatpush1.msra.mxu0 0.0
    %1743 = vmatprep.subr.mxu0 0.0
    %1744 = vmatpush1.msra.mxu0 0.0
    %1745 = vmatprep.subr.mxu0 0.0
    %1746 = vmatpush1.msra.mxu0 0.0
    %1747 = vmatprep.subr.mxu0 0.0
    %1748 = vmatpush1.msra.mxu0 0.0
    %1749 = vmatprep.subr.mxu0 0.0
    %1750 = vmatpush1.msra.mxu0 0.0
    %1751 = vmatprep.subr.mxu0 0.0
    %1752 = vmatpush1.msra.mxu0 0.0
    %1753 = vmatprep.subr.mxu0 0.0
    %1754 = vmatpush1.msra.mxu0 0.0
    %1755 = vmatprep.subr.mxu0 0.0
    %1756 = vmatpush1.msra.mxu0 0.0
    %1757 = vmatprep.subr.mxu0 0.0
    %1758 = vmatpush1.msra.mxu0 0.0
    %1759 = vmatprep.subr.mxu0 0.0
    %1760 = vmatpush1.msra.mxu0 0.0
    %1761 = vmatprep.subr.mxu0 0.0
    %1762 = vmatpush1.msra.mxu0 0.0
    %1763 = vmatprep.subr.mxu0 0.0
    %1764 = vmatpush1.msra.mxu0 0.0
    %1765 = vmatprep.subr.mxu0 0.0
    %1766 = vmatpush1.msra.mxu0 0.0
    %1767 = vmatprep.subr.mxu0 0.0
    %1768 = vmatpush1.msra.mxu0 0.0
    %1769 = vmatprep.subr.mxu0 0.0
    %1770 = vmatpush1.msra.mxu0 0.0
    %1771 = vmatprep.subr.mxu0 0.0
    %1772 = vmatpush1.msra.mxu0 0.0
    %1773 = vmatprep.subr.mxu0 0.0
    %1774 = vmatpush1.msra.mxu0 0.0
    %1775 = vmatprep.subr.mxu0 0.0
    %1776 = vmatpush1.msra.mxu0 0.0
    %1777 = vmatprep.subr.mxu0 0.0
    %1778 = vmatpush1.msra.mxu0 0.0
    %1779 = vmatprep.subr.mxu0 0.0
    %1780 = vmatpush1.msra.mxu0 0.0
    %1781 = vmatprep.subr.mxu0 0.0
    %1782 = vmatpush1.msra.mxu0 0.0
    %1783 = vmatprep.subr.mxu0 0.0
    %1784 = vmatpush1.msra.mxu0 0.0
    %1785 = vmatprep.mubr.f32.mxu0 0.0
    %1786 = vmatmul.mubr.f32.gmra.mrb[0].mxu0 %v1717
    %v1787 = vpop.f32.mrb[0].mxu0
    %v1788 = vadd.f32 0.0, %v1787
    %v1789 = vpop.f32.mrb[0].mxu0
    %1790 = vmatprep.mubr.f32.mxu0 0.0
    %1791 = vmatmul.mubr.f32.gmra.mrb[0].mxu0 %v1719
    %v1792 = vpop.f32.mrb[0].mxu0
    %v1793 = vadd.f32 0.0, %v1792
    %v1794 = vpop.f32.mrb[0].mxu0
    %1795 = vdwg.mxu0
    %v1796 = vadd.f32 %v1410, %v1788
    %v1797 = vadd.f32 %v1415, %v1793
    %v1798 = vxor.u32 %v1796, 2147483648
    %v1799 = vxor.u32 %v1797, 2147483648
    %v1800 = vmul.f32 %v1798, 1.442695
    %v1801 = vpow.pop %v1800
    %v1802 = vmul.f32 %v1799, 1.442695
    %v1803 = vpow.pop %v1802
    %v1804 = vadd.f32 %v1801, 1.0
    %v1805 = vadd.f32 %v1803, 1.0
    %v1806 = vrcp.pop %v1804
    %v1807 = vmul.f32 1.0, %v1806
    %v1808 = vrcp.pop %v1805
    %v1809 = vmul.f32 1.0, %v1808
    %v1810 = vtanh.pop %v1796
    %v1811 = vtanh.pop %v1797
    %v1812 = vmul.f32 %v1807, %v1697
    %v1813 = vmul.f32 %v1809, %v1698
    %1816 = vrot.lane.b32.xlu0 %v1810, 64
    %v1817 = vpop.permute.xlu0 %1816
    %1818 = vrot.lane.b32.xlu0 %v1811, 64
    %v1819 = vpop.permute.xlu0 %1818
    %v1822 = vmul.f32 %v1807, %v1817
    %v1823 = vmul.f32 %v1809, %v1819
    %1826 = vrot.lane.b32.xlu0 %v1822, 32
    %v1827 = vpop.permute.xlu0 %1826
    %1828 = vrot.lane.b32.xlu0 %v1823, 32
    %v1829 = vpop.permute.xlu0 %1828
    %v1832 = vadd.f32 %v1812, %v1827
    %v1833 = vadd.f32 %v1813, %v1829
    %v1834 = vtanh.pop %v1832
    %v1835 = vtanh.pop %v1833
    %1838 = vrot.lane.b32.xlu0 %v1834, 64
    %v1839 = vpop.permute.xlu0 %1838
    %1840 = vrot.lane.b32.xlu0 %v1835, 64
    %v1841 = vpop.permute.xlu0 %1840
    %v1844 = vmul.f32 %v1807, %v1839
    %v1845 = vmul.f32 %v1809, %v1841
    %1848 = vrot.lane.b32.xlu0 %v1844, 32
    %v1849 = vpop.permute.xlu0 %1848
    %1850 = vrot.lane.b32.xlu0 %v1845, 32
    %v1851 = vpop.permute.xlu0 %1850
    %v1852 = vsel %vm415, %v1849, 0
    %v1854 = vsel %vm415, %v1851, 0
    %1856 = vmatprep.subr.mxu0 0.0
    %1857 = vmatpush1.msra.mxu0 %v1278
    %1858 = vmatprep.subr.mxu0 0.0
    %1859 = vmatpush1.msra.mxu0 %v1279
    %1860 = vmatprep.subr.mxu0 0.0
    %1861 = vmatpush1.msra.mxu0 %v1280
    %1862 = vmatprep.subr.mxu0 0.0
    %1863 = vmatpush1.msra.mxu0 %v1281
    %1864 = vmatprep.subr.mxu0 0.0
    %1865 = vmatpush1.msra.mxu0 0.0
    %1866 = vmatprep.subr.mxu0 0.0
    %1867 = vmatpush1.msra.mxu0 0.0
    %1868 = vmatprep.subr.mxu0 0.0
    %1869 = vmatpush1.msra.mxu0 0.0
    %1870 = vmatprep.subr.mxu0 0.0
    %1871 = vmatpush1.msra.mxu0 0.0
    %1872 = vmatprep.subr.mxu0 0.0
    %1873 = vmatpush1.msra.mxu0 0.0
    %1874 = vmatprep.subr.mxu0 0.0
    %1875 = vmatpush1.msra.mxu0 0.0
    %1876 = vmatprep.subr.mxu0 0.0
    %1877 = vmatpush1.msra.mxu0 0.0
    %1878 = vmatprep.subr.mxu0 0.0
    %1879 = vmatpush1.msra.mxu0 0.0
    %1880 = vmatprep.subr.mxu0 0.0
    %1881 = vmatpush1.msra.mxu0 0.0
    %1882 = vmatprep.subr.mxu0 0.0
    %1883 = vmatpush1.msra.mxu0 0.0
    %1884 = vmatprep.subr.mxu0 0.0
    %1885 = vmatpush1.msra.mxu0 0.0
    %1886 = vmatprep.subr.mxu0 0.0
    %1887 = vmatpush1.msra.mxu0 0.0
    %1888 = vmatprep.subr.mxu0 0.0
    %1889 = vmatpush1.msra.mxu0 0.0
    %1890 = vmatprep.subr.mxu0 0.0
    %1891 = vmatpush1.msra.mxu0 0.0
    %1892 = vmatprep.subr.mxu0 0.0
    %1893 = vmatpush1.msra.mxu0 0.0
    %1894 = vmatprep.subr.mxu0 0.0
    %1895 = vmatpush1.msra.mxu0 0.0
    %1896 = vmatprep.subr.mxu0 0.0
    %1897 = vmatpush1.msra.mxu0 0.0
    %1898 = vmatprep.subr.mxu0 0.0
    %1899 = vmatpush1.msra.mxu0 0.0
    %1900 = vmatprep.subr.mxu0 0.0
    %1901 = vmatpush1.msra.mxu0 0.0
    %1902 = vmatprep.subr.mxu0 0.0
    %1903 = vmatpush1.msra.mxu0 0.0
    %1904 = vmatprep.subr.mxu0 0.0
    %1905 = vmatpush1.msra.mxu0 0.0
    %1906 = vmatprep.subr.mxu0 0.0
    %1907 = vmatpush1.msra.mxu0 0.0
    %1908 = vmatprep.subr.mxu0 0.0
    %1909 = vmatpush1.msra.mxu0 0.0
    %1910 = vmatprep.subr.mxu0 0.0
    %1911 = vmatpush1.msra.mxu0 0.0
    %1912 = vmatprep.subr.mxu0 0.0
    %1913 = vmatpush1.msra.mxu0 0.0
    %1914 = vmatprep.subr.mxu0 0.0
    %1915 = vmatpush1.msra.mxu0 0.0
    %1916 = vmatprep.subr.mxu0 0.0
    %1917 = vmatpush1.msra.mxu0 0.0
    %1918 = vmatprep.subr.mxu0 0.0
    %1919 = vmatpush1.msra.mxu0 0.0
    %1920 = vmatprep.mubr.f32.mxu0 0.0
    %1921 = vmatmul.mubr.f32.gmra.mrb[0].mxu0 %v1852
    %v1922 = vpop.f32.mrb[0].mxu0
    %v1923 = vadd.f32 0.0, %v1922
    %v1924 = vpop.f32.mrb[0].mxu0
    %1925 = vmatprep.mubr.f32.mxu0 0.0
    %1926 = vmatmul.mubr.f32.gmra.mrb[0].mxu0 %v1854
    %v1927 = vpop.f32.mrb[0].mxu0
    %v1928 = vadd.f32 0.0, %v1927
    %v1929 = vpop.f32.mrb[0].mxu0
    %1930 = vdwg.mxu0
    %v1931 = vadd.f32 %v1420, %v1923
    %v1932 = vadd.f32 %v1425, %v1928
    %v1933 = vxor.u32 %v1931, 2147483648
    %v1934 = vxor.u32 %v1932, 2147483648
    %v1935 = vmul.f32 %v1933, 1.442695
    %v1936 = vpow.pop %v1935
    %v1937 = vmul.f32 %v1934, 1.442695
    %v1938 = vpow.pop %v1937
    %v1939 = vadd.f32 %v1936, 1.0
    %v1940 = vadd.f32 %v1938, 1.0
    %v1941 = vrcp.pop %v1939
    %v1942 = vmul.f32 1.0, %v1941
    %v1943 = vrcp.pop %v1940
    %v1944 = vmul.f32 1.0, %v1943
    %v1945 = vtanh.pop %v1931
    %v1946 = vtanh.pop %v1932
    %v1947 = vmul.f32 %v1942, %v1832
    %v1948 = vmul.f32 %v1944, %v1833
    %1951 = vrot.lane.b32.xlu0 %v1945, 64
    %v1952 = vpop.permute.xlu0 %1951
    %1953 = vrot.lane.b32.xlu0 %v1946, 64
    %v1954 = vpop.permute.xlu0 %1953
    %v1957 = vmul.f32 %v1942, %v1952
    %v1958 = vmul.f32 %v1944, %v1954
    %1961 = vrot.lane.b32.xlu0 %v1957, 32
    %v1962 = vpop.permute.xlu0 %1961
    %1963 = vrot.lane.b32.xlu0 %v1958, 32
    %v1964 = vpop.permute.xlu0 %1963
    %v1967 = vadd.f32 %v1947, %v1962
    %v1968 = vadd.f32 %v1948, %v1964
    %v1969 = vtanh.pop %v1967
    %v1970 = vtanh.pop %v1968
    %1973 = vrot.lane.b32.xlu0 %v1969, 64
    %v1974 = vpop.permute.xlu0 %1973
    %1975 = vrot.lane.b32.xlu0 %v1970, 64
    %v1976 = vpop.permute.xlu0 %1975
    %v1979 = vmul.f32 %v1942, %v1974
    %v1980 = vmul.f32 %v1944, %v1976
    %1983 = vrot.lane.b32.xlu0 %v1979, 32
    %v1984 = vpop.permute.xlu0 %1983
    %1985 = vrot.lane.b32.xlu0 %v1980, 32
    %v1986 = vpop.permute.xlu0 %1985
    %v1987 = vsel %vm415, %v1984, 0
    %v1989 = vsel %vm415, %v1986, 0
    %1991 = vmatprep.subr.mxu0 0.0
    %1992 = vmatpush1.msra.mxu0 %v1278
    %1993 = vmatprep.subr.mxu0 0.0
    %1994 = vmatpush1.msra.mxu0 %v1279
    %1995 = vmatprep.subr.mxu0 0.0
    %1996 = vmatpush1.msra.mxu0 %v1280
    %1997 = vmatprep.subr.mxu0 0.0
    %1998 = vmatpush1.msra.mxu0 %v1281
    %1999 = vmatprep.subr.mxu0 0.0
    %2000 = vmatpush1.msra.mxu0 0.0
    %2001 = vmatprep.subr.mxu0 0.0
    %2002 = vmatpush1.msra.mxu0 0.0
    %2003 = vmatprep.subr.mxu0 0.0
    %2004 = vmatpush1.msra.mxu0 0.0
    %2005 = vmatprep.subr.mxu0 0.0
    %2006 = vmatpush1.msra.mxu0 0.0
    %2007 = vmatprep.subr.mxu0 0.0
    %2008 = vmatpush1.msra.mxu0 0.0
    %2009 = vmatprep.subr.mxu0 0.0
    %2010 = vmatpush1.msra.mxu0 0.0
    %2011 = vmatprep.subr.mxu0 0.0
    %2012 = vmatpush1.msra.mxu0 0.0
    %2013 = vmatprep.subr.mxu0 0.0
    %2014 = vmatpush1.msra.mxu0 0.0
    %2015 = vmatprep.subr.mxu0 0.0
    %2016 = vmatpush1.msra.mxu0 0.0
    %2017 = vmatprep.subr.mxu0 0.0
    %2018 = vmatpush1.msra.mxu0 0.0
    %2019 = vmatprep.subr.mxu0 0.0
    %2020 = vmatpush1.msra.mxu0 0.0
    %2021 = vmatprep.subr.mxu0 0.0
    %2022 = vmatpush1.msra.mxu0 0.0
    %2023 = vmatprep.subr.mxu0 0.0
    %2024 = vmatpush1.msra.mxu0 0.0
    %2025 = vmatprep.subr.mxu0 0.0
    %2026 = vmatpush1.msra.mxu0 0.0
    %2027 = vmatprep.subr.mxu0 0.0
    %2028 = vmatpush1.msra.mxu0 0.0
    %2029 = vmatprep.subr.mxu0 0.0
    %2030 = vmatpush1.msra.mxu0 0.0
    %2031 = vmatprep.subr.mxu0 0.0
    %2032 = vmatpush1.msra.mxu0 0.0
    %2033 = vmatprep.subr.mxu0 0.0
    %2034 = vmatpush1.msra.mxu0 0.0
    %2035 = vmatprep.subr.mxu0 0.0
    %2036 = vmatpush1.msra.mxu0 0.0
    %2037 = vmatprep.subr.mxu0 0.0
    %2038 = vmatpush1.msra.mxu0 0.0
    %2039 = vmatprep.subr.mxu0 0.0
    %2040 = vmatpush1.msra.mxu0 0.0
    %2041 = vmatprep.subr.mxu0 0.0
    %2042 = vmatpush1.msra.mxu0 0.0
    %2043 = vmatprep.subr.mxu0 0.0
    %2044 = vmatpush1.msra.mxu0 0.0
    %2045 = vmatprep.subr.mxu0 0.0
    %2046 = vmatpush1.msra.mxu0 0.0
    %2047 = vmatprep.subr.mxu0 0.0
    %2048 = vmatpush1.msra.mxu0 0.0
    %2049 = vmatprep.subr.mxu0 0.0
    %2050 = vmatpush1.msra.mxu0 0.0
    %2051 = vmatprep.subr.mxu0 0.0
    %2052 = vmatpush1.msra.mxu0 0.0
    %2053 = vmatprep.subr.mxu0 0.0
    %2054 = vmatpush1.msra.mxu0 0.0
    %2055 = vmatprep.mubr.f32.mxu0 0.0
    %2056 = vmatmul.mubr.f32.gmra.mrb[0].mxu0 %v1987
    %v2057 = vpop.f32.mrb[0].mxu0
    %v2058 = vadd.f32 0.0, %v2057
    %v2059 = vpop.f32.mrb[0].mxu0
    %2060 = vmatprep.mubr.f32.mxu0 0.0
    %2061 = vmatmul.mubr.f32.gmra.mrb[0].mxu0 %v1989
    %v2062 = vpop.f32.mrb[0].mxu0
    %v2063 = vadd.f32 0.0, %v2062
    %v2064 = vpop.f32.mrb[0].mxu0
    %2065 = vdwg.mxu0
    %v2066 = vadd.f32 %v1430, %v2058
    %v2067 = vadd.f32 %v1435, %v2063
    %v2068 = vxor.u32 %v2066, 2147483648
    %v2069 = vxor.u32 %v2067, 2147483648
    %v2070 = vmul.f32 %v2068, 1.442695
    %v2071 = vpow.pop %v2070
    %v2072 = vmul.f32 %v2069, 1.442695
    %v2073 = vpow.pop %v2072
    %v2074 = vadd.f32 %v2071, 1.0
    %v2075 = vadd.f32 %v2073, 1.0
    %v2076 = vrcp.pop %v2074
    %v2077 = vmul.f32 1.0, %v2076
    %v2078 = vrcp.pop %v2075
    %v2079 = vmul.f32 1.0, %v2078
    %v2080 = vtanh.pop %v2066
    %v2081 = vtanh.pop %v2067
    %v2082 = vmul.f32 %v2077, %v1967
    %v2083 = vmul.f32 %v2079, %v1968
    %2086 = vrot.lane.b32.xlu0 %v2080, 64
    %v2087 = vpop.permute.xlu0 %2086
    %2088 = vrot.lane.b32.xlu0 %v2081, 64
    %v2089 = vpop.permute.xlu0 %2088
    %v2092 = vmul.f32 %v2077, %v2087
    %v2093 = vmul.f32 %v2079, %v2089
    %2096 = vrot.lane.b32.xlu0 %v2092, 32
    %v2097 = vpop.permute.xlu0 %2096
    %2098 = vrot.lane.b32.xlu0 %v2093, 32
    %v2099 = vpop.permute.xlu0 %2098
    %v2102 = vadd.f32 %v2082, %v2097
    %v2103 = vadd.f32 %v2083, %v2099
    %v2104 = vtanh.pop %v2102
    %v2105 = vtanh.pop %v2103
    %2108 = vrot.lane.b32.xlu0 %v2104, 64
    %v2109 = vpop.permute.xlu0 %2108
    %2110 = vrot.lane.b32.xlu0 %v2105, 64
    %v2111 = vpop.permute.xlu0 %2110
    %v2114 = vmul.f32 %v2077, %v2109
    %v2115 = vmul.f32 %v2079, %v2111
    %2118 = vrot.lane.b32.xlu0 %v2114, 32
    %v2119 = vpop.permute.xlu0 %2118
    %2120 = vrot.lane.b32.xlu0 %v2115, 32
    %v2121 = vpop.permute.xlu0 %2120
    %v2122 = vsel %vm415, %v2119, 0
    %v2124 = vsel %vm415, %v2121, 0
    %2126 = vmatprep.subr.mxu0 0.0
    %2127 = vmatpush1.msra.mxu0 %v1278
    %2128 = vmatprep.subr.mxu0 0.0
    %2129 = vmatpush1.msra.mxu0 %v1279
    %2130 = vmatprep.subr.mxu0 0.0
    %2131 = vmatpush1.msra.mxu0 %v1280
    %2132 = vmatprep.subr.mxu0 0.0
    %2133 = vmatpush1.msra.mxu0 %v1281
    %2134 = vmatprep.subr.mxu0 0.0
    %2135 = vmatpush1.msra.mxu0 0.0
    %2136 = vmatprep.subr.mxu0 0.0
    %2137 = vmatpush1.msra.mxu0 0.0
    %2138 = vmatprep.subr.mxu0 0.0
    %2139 = vmatpush1.msra.mxu0 0.0
    %2140 = vmatprep.subr.mxu0 0.0
    %2141 = vmatpush1.msra.mxu0 0.0
    %2142 = vmatprep.subr.mxu0 0.0
    %2143 = vmatpush1.msra.mxu0 0.0
    %2144 = vmatprep.subr.mxu0 0.0
    %2145 = vmatpush1.msra.mxu0 0.0
    %2146 = vmatprep.subr.mxu0 0.0
    %2147 = vmatpush1.msra.mxu0 0.0
    %2148 = vmatprep.subr.mxu0 0.0
    %2149 = vmatpush1.msra.mxu0 0.0
    %2150 = vmatprep.subr.mxu0 0.0
    %2151 = vmatpush1.msra.mxu0 0.0
    %2152 = vmatprep.subr.mxu0 0.0
    %2153 = vmatpush1.msra.mxu0 0.0
    %2154 = vmatprep.subr.mxu0 0.0
    %2155 = vmatpush1.msra.mxu0 0.0
    %2156 = vmatprep.subr.mxu0 0.0
    %2157 = vmatpush1.msra.mxu0 0.0
    %2158 = vmatprep.subr.mxu0 0.0
    %2159 = vmatpush1.msra.mxu0 0.0
    %2160 = vmatprep.subr.mxu0 0.0
    %2161 = vmatpush1.msra.mxu0 0.0
    %2162 = vmatprep.subr.mxu0 0.0
    %2163 = vmatpush1.msra.mxu0 0.0
    %2164 = vmatprep.subr.mxu0 0.0
    %2165 = vmatpush1.msra.mxu0 0.0
    %2166 = vmatprep.subr.mxu0 0.0
    %2167 = vmatpush1.msra.mxu0 0.0
    %2168 = vmatprep.subr.mxu0 0.0
    %2169 = vmatpush1.msra.mxu0 0.0
    %2170 = vmatprep.subr.mxu0 0.0
    %2171 = vmatpush1.msra.mxu0 0.0
    %2172 = vmatprep.subr.mxu0 0.0
    %2173 = vmatpush1.msra.mxu0 0.0
    %2174 = vmatprep.subr.mxu0 0.0
    %2175 = vmatpush1.msra.mxu0 0.0
    %2176 = vmatprep.subr.mxu0 0.0
    %2177 = vmatpush1.msra.mxu0 0.0
    %2178 = vmatprep.subr.mxu0 0.0
    %2179 = vmatpush1.msra.mxu0 0.0
    %2180 = vmatprep.subr.mxu0 0.0
    %2181 = vmatpush1.msra.mxu0 0.0
    %2182 = vmatprep.subr.mxu0 0.0
    %2183 = vmatpush1.msra.mxu0 0.0
    %2184 = vmatprep.subr.mxu0 0.0
    %2185 = vmatpush1.msra.mxu0 0.0
    %2186 = vmatprep.subr.mxu0 0.0
    %2187 = vmatpush1.msra.mxu0 0.0
    %2188 = vmatprep.subr.mxu0 0.0
    %2189 = vmatpush1.msra.mxu0 0.0
    %2190 = vmatprep.mubr.f32.mxu0 0.0
    %2191 = vmatmul.mubr.f32.gmra.mrb[0].mxu0 %v2122
    %v2192 = vpop.f32.mrb[0].mxu0
    %v2193 = vadd.f32 0.0, %v2192
    %v2194 = vpop.f32.mrb[0].mxu0
    %2195 = vmatprep.mubr.f32.mxu0 0.0
    %2196 = vmatmul.mubr.f32.gmra.mrb[0].mxu0 %v2124
    %v2197 = vpop.f32.mrb[0].mxu0
    %v2198 = vadd.f32 0.0, %v2197
    %v2199 = vpop.f32.mrb[0].mxu0
    %2200 = vdwg.mxu0
    %v2201 = vadd.f32 %v1440, %v2193
    %v2202 = vadd.f32 %v1445, %v2198
    %v2203 = vxor.u32 %v2201, 2147483648
    %v2204 = vxor.u32 %v2202, 2147483648
    %v2205 = vmul.f32 %v2203, 1.442695
    %v2206 = vpow.pop %v2205
    %v2207 = vmul.f32 %v2204, 1.442695
    %v2208 = vpow.pop %v2207
    %v2209 = vadd.f32 %v2206, 1.0
    %v2210 = vadd.f32 %v2208, 1.0
    %v2211 = vrcp.pop %v2209
    %v2212 = vmul.f32 1.0, %v2211
    %v2213 = vrcp.pop %v2210
    %v2214 = vmul.f32 1.0, %v2213
    %v2215 = vtanh.pop %v2201
    %v2216 = vtanh.pop %v2202
    %v2217 = vmul.f32 %v2212, %v2102
    %v2218 = vmul.f32 %v2214, %v2103
    %2221 = vrot.lane.b32.xlu0 %v2215, 64
    %v2222 = vpop.permute.xlu0 %2221
    %2223 = vrot.lane.b32.xlu0 %v2216, 64
    %v2224 = vpop.permute.xlu0 %2223
    %v2227 = vmul.f32 %v2212, %v2222
    %v2228 = vmul.f32 %v2214, %v2224
    %2231 = vrot.lane.b32.xlu0 %v2227, 32
    %v2232 = vpop.permute.xlu0 %2231
    %2233 = vrot.lane.b32.xlu0 %v2228, 32
    %v2234 = vpop.permute.xlu0 %2233
    %v2237 = vadd.f32 %v2217, %v2232
    %v2238 = vadd.f32 %v2218, %v2234
    %v2239 = vtanh.pop %v2237
    %v2240 = vtanh.pop %v2238
    %2243 = vrot.lane.b32.xlu0 %v2239, 64
    %v2244 = vpop.permute.xlu0 %2243
    %2245 = vrot.lane.b32.xlu0 %v2240, 64
    %v2246 = vpop.permute.xlu0 %2245
    %v2249 = vmul.f32 %v2212, %v2244
    %v2250 = vmul.f32 %v2214, %v2246
    %v2251 = vld [vmem:[#allocation5 + $0x148] sm:$0xff]
    %v2252 = vld [vmem:[#allocation5 + $0x150] sm:$0xff]
    %v2253 = vld [vmem:[#allocation5 + $0x158] sm:$0xff]
    %v2254 = vld [vmem:[#allocation5 + $0x160] sm:$0xff]
    %v2255 = vld [vmem:[#allocation5 + $0x168] sm:$0x1]
    %v2256 = vlaneseq
    %v2257 = vshrl.u32 %v2256, 7
    %v2258 = vsub.s32 0, %v2257
    %v2259 = vrot.slane %v2255, %v2258
    %2262 = vrot.lane.b32.xlu0 %v2249, 32
    %v2263 = vpop.permute.xlu0 %2262
    %2264 = vrot.lane.b32.xlu0 %v2250, 32
    %v2265 = vpop.permute.xlu0 %2264
    %v2266 = vsel %vm415, %v2263, 0
    %v2268 = vsel %vm415, %v2265, 0
    %2270 = vmatprep.subr.mxu0 0.0
    %2271 = vmatpush1.msra.mxu0 %v2251
    %2272 = vmatprep.subr.mxu0 0.0
    %2273 = vmatpush1.msra.mxu0 %v2252
    %2274 = vmatprep.subr.mxu0 0.0
    %2275 = vmatpush1.msra.mxu0 %v2253
    %2276 = vmatprep.subr.mxu0 0.0
    %2277 = vmatpush1.msra.mxu0 %v2254
    %2278 = vmatprep.subr.mxu0 0.0
    %2279 = vmatpush1.msra.mxu0 0.0
    %2280 = vmatprep.subr.mxu0 0.0
    %2281 = vmatpush1.msra.mxu0 0.0
    %2282 = vmatprep.subr.mxu0 0.0
    %2283 = vmatpush1.msra.mxu0 0.0
    %2284 = vmatprep.subr.mxu0 0.0
    %2285 = vmatpush1.msra.mxu0 0.0
    %2286 = vmatprep.subr.mxu0 0.0
    %2287 = vmatpush1.msra.mxu0 0.0
    %2288 = vmatprep.subr.mxu0 0.0
    %2289 = vmatpush1.msra.mxu0 0.0
    %2290 = vmatprep.subr.mxu0 0.0
    %2291 = vmatpush1.msra.mxu0 0.0
    %2292 = vmatprep.subr.mxu0 0.0
    %2293 = vmatpush1.msra.mxu0 0.0
    %2294 = vmatprep.subr.mxu0 0.0
    %2295 = vmatpush1.msra.mxu0 0.0
    %2296 = vmatprep.subr.mxu0 0.0
    %2297 = vmatpush1.msra.mxu0 0.0
    %2298 = vmatprep.subr.mxu0 0.0
    %2299 = vmatpush1.msra.mxu0 0.0
    %2300 = vmatprep.subr.mxu0 0.0
    %2301 = vmatpush1.msra.mxu0 0.0
    %2302 = vmatprep.subr.mxu0 0.0
    %2303 = vmatpush1.msra.mxu0 0.0
    %2304 = vmatprep.subr.mxu0 0.0
    %2305 = vmatpush1.msra.mxu0 0.0
    %2306 = vmatprep.subr.mxu0 0.0
    %2307 = vmatpush1.msra.mxu0 0.0
    %2308 = vmatprep.subr.mxu0 0.0
    %2309 = vmatpush1.msra.mxu0 0.0
    %2310 = vmatprep.subr.mxu0 0.0
    %2311 = vmatpush1.msra.mxu0 0.0
    %2312 = vmatprep.subr.mxu0 0.0
    %2313 = vmatpush1.msra.mxu0 0.0
    %2314 = vmatprep.subr.mxu0 0.0
    %2315 = vmatpush1.msra.mxu0 0.0
    %2316 = vmatprep.subr.mxu0 0.0
    %2317 = vmatpush1.msra.mxu0 0.0
    %2318 = vmatprep.subr.mxu0 0.0
    %2319 = vmatpush1.msra.mxu0 0.0
    %2320 = vmatprep.subr.mxu0 0.0
    %2321 = vmatpush1.msra.mxu0 0.0
    %2322 = vmatprep.subr.mxu0 0.0
    %2323 = vmatpush1.msra.mxu0 0.0
    %2324 = vmatprep.subr.mxu0 0.0
    %2325 = vmatpush1.msra.mxu0 0.0
    %2326 = vmatprep.subr.mxu0 0.0
    %2327 = vmatpush1.msra.mxu0 0.0
    %2328 = vmatprep.subr.mxu0 0.0
    %2329 = vmatpush1.msra.mxu0 0.0
    %2330 = vmatprep.subr.mxu0 0.0
    %2331 = vmatpush1.msra.mxu0 0.0
    %2332 = vmatprep.subr.mxu0 0.0
    %2333 = vmatpush1.msra.mxu0 0.0
    %2334 = vmatprep.mubr.f32.mxu0 0.0
    %2335 = vmatmul.mubr.f32.gmra.mrb[0].mxu0 %v2266
    %v2336 = vpop.f32.mrb[0].mxu0
    %v2337 = vadd.f32 %v2259, %v2336
    %v2338 = vpop.f32.mrb[0].mxu0
    %2339 = vmatprep.mubr.f32.mxu0 0.0
    %2340 = vmatmul.mubr.f32.gmra.mrb[0].mxu0 %v2268
    %v2341 = vpop.f32.mrb[0].mxu0
    %v2342 = vadd.f32 %v2259, %v2341
    %v2343 = vpop.f32.mrb[0].mxu0
    %2344 = vdwg.mxu0
    %2345 = vst [vmem:[#allocation7] sm:$0xff] %v2337
    %2346 = vst [vmem:[#allocation7 + $0x8] sm:$0xff] %v2342
    // Predicated region
    $region18: #{tpu_custom_call.1} parent=1 // pred_check
      _
    $region19: #{tpu_custom_call.1} parent=1 // pred_check_branch
      %2348 = sbr.rel (0) target = $region21
    $region20: #{tpu_custom_call.1} parent=1 // pred_region
      %s2350 = ssub.s32 256, 256
      %2351 = vsyncadd [#allocation4], %s2350
      %s2352 = sshll.u32 [#allocation7], 4
      %s2353 = int_to_ptr.vmem [resolvable:$true] %s2352
      %2358 = dma.vmem_to_hbm [thread:$0]  %s2353, 256, %s2, [#allocation4], 128, 128, 8
    $region21: #{tpu_custom_call.1} parent=1 // pred_fallthru
      _
    // Predicated region
    $region22: #{tpu_custom_call.1} parent=1 // pred_check
      _
    $region23: #{tpu_custom_call.1} parent=1 // pred_check_branch
      %2360 = sbr.rel (0) target = $region25
    $region24: #{tpu_custom_call.1} parent=1 // pred_region
      %2361 = dma.done [#allocation4], 256
    $region25: #{tpu_custom_call.1} parent=1 // pred_fallthru
      _
    %2362 = vsyncpa [#allocation3], 1
    %2363 = vsyncpa [#allocation6], 1
    %2364 = vsyncpa [#allocation4], 1

</llo_original>
